<compile_context>
chip_gen: v6e
topology: v6e:2x2x1
jax: 0.10.0
libtpu: 0.0.40
codegen_flags: <defaults>
</compile_context>

<pallas_src>
import functools

import jax
import jax.numpy as jnp
import numpy as np
from jax import lax
from jax.experimental import pallas as pl
from jax.experimental.pallas import tpu as pltpu

BN_EPS = 1e-5
LEAKY_SLOPE = 0.01


def _sigmoid(x):
    return 1.0 / (1.0 + jnp.exp(-x))


def _round_up(a, m):
    return (a + m - 1) // m * m


def binary_lstm_kernel(x_ref, wih_ref, whh_ref, bias_ref,
                       fc1w_ref, fc1b_ref, fc2w_ref,
                       o_ref, gx_ref, hall_ref, hc_ref,
                       *, chunk_t, bb, hidden):
    """One (batch-block, time-chunk) step: LSTM recurrence + classifier head.

    x_ref:    (CT, BB, D)    time-major rows for this block/chunk
    wih_ref:  (D, 4H)        W_ih^T
    whh_ref:  (H, 4H)        W_hh^T
    bias_ref: (1, 4H)        b_ih + b_hh
    fc1w_ref: (H, 128)       (BatchNorm-folded fc1 weight)^T, cols >= 6 zero
    fc1b_ref: (1, 128)       folded fc1 bias; col 6 = 1.0 (fc2-bias carrier)
    fc2w_ref: (1, 128)       fc2 weight row; col 6 = fc2 bias; rest zero
    o_ref:    (1, CT*BB, 1)  sigmoid(fc2) — compact, 4 B per scalar
    gx_ref:   (CT*BB, 4H)    scratch: hoisted input projection for the chunk
    hall_ref: (CT*BB, H)     scratch: all per-timestep hidden states (chunk)
    hc_ref:   (2, BB, H)     scratch: (h, c) carry across time chunks
    """
    nt = pl.program_id(1)

    @pl.when(nt == 0)
    def _():
        hc_ref[...] = jnp.zeros_like(hc_ref)

    d = x_ref.shape[-1]
    # Layout-preserving collapse (BB % 8 == 0, D stays the lane dim).
    x2 = x_ref[...].reshape(chunk_t * bb, d)

    # Hoisted input projection + bias for the whole chunk: one MXU pass.
    gx_ref[...] = (jnp.dot(x2, wih_ref[...], preferred_element_type=jnp.float32)
                   + bias_ref[...])

    whh = whh_ref[...]                                    # loaded once

    def step(t, carry):
        h_prev, c_prev = carry
        base = pl.multiple_of(t * bb, bb)
        gates = (gx_ref[pl.ds(base, bb), :]
                 + jnp.dot(h_prev, whh, preferred_element_type=jnp.float32))
        # PyTorch gate order: i, f, g, o.  ONE full-width sigmoid over all
        # 4H lanes (EUP cost is per-vreg, not per-useful-lane), then slice.
        sg = _sigmoid(gates)
        i_g = sg[:, 0 * hidden:1 * hidden]
        f_g = sg[:, 1 * hidden:2 * hidden]
        o_g = sg[:, 3 * hidden:4 * hidden]
        g_g = jnp.tanh(gates[:, 2 * hidden:3 * hidden])
        c_new = f_g * c_prev + i_g * g_g
        h_new = o_g * jnp.tanh(c_new)
        hall_ref[pl.ds(base, bb), :] = h_new
        return (h_new, c_new)

    h0 = hc_ref[0]
    c0 = hc_ref[1]
    h_last, c_last = lax.fori_loop(0, chunk_t, step, (h0, c0),
                                   unroll=min(chunk_t, 8))
    hc_ref[0] = h_last
    hc_ref[1] = c_last

    # Classifier head on all CT*BB rows at once:
    # fc1 (+ folded eval-BatchNorm) -> LeakyReLU -> [Dropout = identity] ->
    # fc2 (VPU multiply + lane reduce; fc2 bias rides the constant-1 column)
    # -> sigmoid.
    hall = hall_ref[...]                                  # (CT*BB, H)
    z = (jnp.dot(hall, fc1w_ref[...], preferred_element_type=jnp.float32)
         + fc1b_ref[...])
    z = jnp.where(z >= 0.0, z, LEAKY_SLOPE * z)           # LeakyReLU
    # TODO(synk): Dropout(0.5) eval-mode identity here.
    y = jnp.sum(z * fc2w_ref[...], axis=-1, keepdims=True)  # (CT*BB, 1)
    o_ref[0] = _sigmoid(y)


@jax.jit
def binary_lstm_forward(x, w_ih, w_hh, b_ih, b_hh,
                        fc1_w, fc1_b, bn_w, bn_b, bn_rm, bn_rv,
                        fc2_w, fc2_b):
    """x: (B, T, D) float32 -> (B, T, 1) float32, eval-mode forward."""
    x = x.astype(jnp.float32)
    B, T, D = x.shape
    H = w_hh.shape[1]
    G = 4 * H
    F1 = fc1_w.shape[0]          # 6
    FP = 128                     # padded lane width for fc1 features

    # ---- batch blocking: fill the MXU M-dim, keep padding low, try NB>=2 ----
    Bp8 = _round_up(B, 8)
    BB = min(128, Bp8)
    if Bp8 >= 16 and Bp8 // BB < 2:      # give v7x's two TCs >= 2 blocks
        BB = _round_up(-(-Bp8 // 2), 8)
    Bp = _round_up(Bp8, BB)
    NB = Bp // BB

    # ---- time chunking: VMEM stays bounded regardless of T ----
    MAX_CT = 32                          # multiple of 8
    if T <= MAX_CT:
        CT, Tp = T, T
    else:
        CT = MAX_CT
        Tp = _round_up(T, CT)
    NT = Tp // CT

    # ---- parameter prep (once, outside the kernel) ----
    wih_t = w_ih.T.astype(jnp.float32)                             # (D, 4H)
    whh_t = w_hh.T.astype(jnp.float32)                             # (H, 4H)
    bias = (b_ih + b_hh).astype(jnp.float32).reshape(1, G)

    # Fold eval-mode BatchNorm1d into fc1 (affine-only in eval mode).
    scale = (bn_w / jnp.sqrt(bn_rv + BN_EPS)).astype(jnp.float32)  # (6,)
    shift = bn_b.astype(jnp.float32) - bn_rm.astype(jnp.float32) * scale
    fc1_w_eff = fc1_w.astype(jnp.float32) * scale[:, None]         # (6, H)
    fc1_b_eff = fc1_b.astype(jnp.float32) * scale + shift          # (6,)

    fc1w_p = jnp.zeros((H, FP), jnp.float32).at[:, :F1].set(fc1_w_eff.T)
    # Column F1 carries a constant 1.0 feature (LeakyReLU(1)=1) so the fc2
    # bias can be folded into the lane-reduce below.
    fc1b_p = (jnp.zeros((1, FP), jnp.float32)
              .at[0, :F1].set(fc1_b_eff)
              .at[0, F1].set(1.0))
    fc2w_row = (jnp.zeros((1, FP), jnp.float32)
                .at[0, :F1].set(fc2_w[0].astype(jnp.float32))
                .at[0, F1].set(fc2_b[0].astype(jnp.float32)))

    # ---- activation layout: single transpose to time-major, pad B and T ----
    x_pad = jnp.pad(x, ((0, Bp - B), (0, 0), (0, 0)))              # (Bp, T, D)
    x_tm = jnp.transpose(x_pad, (1, 0, 2))                         # (T, Bp, D)
    if Tp > T:
        x_tm = jnp.pad(x_tm, ((0, Tp - T), (0, 0), (0, 0)))        # (Tp, Bp, D)

    kernel = functools.partial(binary_lstm_kernel, chunk_t=CT, bb=BB, hidden=H)

    out_p = pl.pallas_call(
        kernel,
        out_shape=jax.ShapeDtypeStruct((NB, Tp * BB, 1), jnp.float32),
        grid_spec=pltpu.PrefetchScalarGridSpec(
            num_scalar_prefetch=0,
            grid=(NB, NT),   # batch blocks (parallel) x time chunks (serial)
            in_specs=[
                pl.BlockSpec((CT, BB, D), lambda nb, nt: (nt, nb, 0)),
                # Grid-invariant weights (constant index maps): fetched once.
                pl.BlockSpec((D, G), lambda nb, nt: (0, 0)),
                pl.BlockSpec((H, G), lambda nb, nt: (0, 0)),
                pl.BlockSpec((1, G), lambda nb, nt: (0, 0)),
                pl.BlockSpec((H, FP), lambda nb, nt: (0, 0)),
                pl.BlockSpec((1, FP), lambda nb, nt: (0, 0)),
                pl.BlockSpec((1, FP), lambda nb, nt: (0, 0)),
            ],
            out_specs=pl.BlockSpec((1, CT * BB, 1), lambda nb, nt: (nb, nt, 0)),
            scratch_shapes=[
                pltpu.VMEM((CT * BB, G), jnp.float32),   # hoisted input proj
                pltpu.VMEM((CT * BB, H), jnp.float32),   # chunk hidden states
                pltpu.VMEM((2, BB, H), jnp.float32),     # (h, c) chunk carry
            ],
        ),
        compiler_params=pltpu.CompilerParams(
            dimension_semantics=("parallel", "arbitrary")),
    )(x_tm, wih_t, whh_t, bias, fc1w_p, fc1b_p, fc2w_row)

    # Un-pad / un-block: rows are (t, b) order within each batch block.
    res = out_p[..., 0].reshape(NB, Tp, BB)[:, :T, :]              # (NB, T, BB)
    res = jnp.transpose(res, (0, 2, 1)).reshape(Bp, T)[:B]         # (B, T)
    return res[:, :, None]                                         # (B, T, 1)


def reference_forward(x, w_ih, w_hh, b_ih, b_hh,
                      fc1_w, fc1_b, bn_w, bn_b, bn_rm, bn_rv,
                      fc2_w, fc2_b):
    """Pure-JAX eval-mode forward matching PyTorch BinaryLSTM.forward."""
    B = x.shape[0]
    H = w_hh.shape[1]

    def step(carry, x_t):
        h, c = carry
        gates = x_t @ w_ih.T + b_ih + h @ w_hh.T + b_hh
        i = _sigmoid(gates[:, 0 * H:1 * H])
        f = _sigmoid(gates[:, 1 * H:2 * H])
        g = jnp.tanh(gates[:, 2 * H:3 * H])
        o = _sigmoid(gates[:, 3 * H:4 * H])
        c = f * c + i * g
        h = o * jnp.tanh(c)
        return (h, c), h

    h0 = jnp.zeros((B, H), jnp.float32)
    c0 = jnp.zeros((B, H), jnp.float32)
    _, hs = lax.scan(step, (h0, c0), jnp.transpose(x, (1, 0, 2)))
    hs = jnp.transpose(hs, (1, 0, 2))                              # (B, T, H)

    z = hs @ fc1_w.T + fc1_b                                       # (B, T, 6)
    z = (z - bn_rm) / jnp.sqrt(bn_rv + BN_EPS) * bn_w + bn_b       # eval BN
    z = jnp.where(z >= 0.0, z, LEAKY_SLOPE * z)                    # LeakyReLU
    return _sigmoid(z @ fc2_w.T + fc2_b)                           # (B, T, 1)


if __name__ == "__main__":
    B, T = 2, 8
    INPUT_SIZE = 32           # nn.LSTM(input_size, input_size, batch_first=True)
    H = INPUT_SIZE

    key = jax.random.PRNGKey(0)
    ks = jax.random.split(key, 13)

    x = jax.random.normal(ks[0], (B, T, INPUT_SIZE), jnp.float32)

    # PyTorch nn.LSTM init: U(-1/sqrt(H), 1/sqrt(H)), gate order i, f, g, o.
    b_l = 1.0 / np.sqrt(H)
    w_ih = jax.random.uniform(ks[1], (4 * H, INPUT_SIZE), jnp.float32, -b_l, b_l)
    w_hh = jax.random.uniform(ks[2], (4 * H, H), jnp.float32, -b_l, b_l)
    b_ih = jax.random.uniform(ks[3], (4 * H,), jnp.float32, -b_l, b_l)
    b_hh = jax.random.uniform(ks[4], (4 * H,), jnp.float32, -b_l, b_l)

    # nn.Linear init: U(-1/sqrt(fan_in), 1/sqrt(fan_in))
    b1 = 1.0 / np.sqrt(H)
    fc1_w = jax.random.uniform(ks[5], (6, H), jnp.float32, -b1, b1)
    fc1_b = jax.random.uniform(ks[6], (6,), jnp.float32, -b1, b1)
    b2 = 1.0 / np.sqrt(6.0)
    fc2_w = jax.random.uniform(ks[7], (1, 6), jnp.float32, -b2, b2)
    fc2_b = jax.random.uniform(ks[8], (1,), jnp.float32, -b2, b2)

    # BatchNorm1d(6): non-trivial eval-mode affine params / running stats.
    bn_w = jax.random.uniform(ks[9], (6,), jnp.float32, 0.5, 1.5)
    bn_b = jax.random.uniform(ks[10], (6,), jnp.float32, -0.2, 0.2)
    bn_rm = jax.random.uniform(ks[11], (6,), jnp.float32, -0.5, 0.5)
    bn_rv = jax.random.uniform(ks[12], (6,), jnp.float32, 0.5, 1.5)

    out = binary_lstm_forward(x, w_ih, w_hh, b_ih, b_hh,
                              fc1_w, fc1_b, bn_w, bn_b, bn_rm, bn_rv,
                              fc2_w, fc2_b)
    out = jax.block_until_ready(out)

    ref = reference_forward(x, w_ih, w_hh, b_ih, b_hh,
                            fc1_w, fc1_b, bn_w, bn_b, bn_rm, bn_rv,
                            fc2_w, fc2_b)
    ref = jax.block_until_ready(ref)

    assert out.shape == (B, T, 1), out.shape
    np.testing.assert_allclose(np.asarray(out), np.asarray(ref),
                               rtol=2e-5, atol=2e-5)
    print("KERNEL_OK")
</pallas_src>

<mosaic_0001>
module attributes {stable_mosaic.version = 11 : i64} {
  func.func @binary_lstm_kernel(%arg0: i32, %arg1: i32, %arg2: memref<8x8x32xf32, #tpu.memory_space<vmem>>, %arg3: memref<32x128xf32, #tpu.memory_space<vmem>>, %arg4: memref<32x128xf32, #tpu.memory_space<vmem>>, %arg5: memref<1x128xf32, #tpu.memory_space<vmem>>, %arg6: memref<32x128xf32, #tpu.memory_space<vmem>>, %arg7: memref<1x128xf32, #tpu.memory_space<vmem>>, %arg8: memref<1x128xf32, #tpu.memory_space<vmem>>, %arg9: memref<1x64x1xf32, #tpu.memory_space<vmem>>, %arg10: memref<64x128xf32, #tpu.memory_space<vmem>>, %arg11: memref<64x32xf32, #tpu.memory_space<vmem>>, %arg12: memref<2x8x32xf32, #tpu.memory_space<vmem>>) attributes {dimension_semantics = [#tpu.dimension_semantics<parallel>, #tpu.dimension_semantics<arbitrary>], iteration_bounds = array<i64: 1, 1>, scalar_prefetch = 0 : i64, scratch_operands = 3 : i64, tpu.core_type = #tpu.core_type<tc>, window_params = [{transform_indices = @transform_0, window_bounds = array<i64: 8, 8, 32>}, {pipeline_mode = #tpu.pipeline_mode<synchronous>, transform_indices = @transform_1, window_bounds = array<i64: 32, 128>}, {pipeline_mode = #tpu.pipeline_mode<synchronous>, transform_indices = @transform_2, window_bounds = array<i64: 32, 128>}, {pipeline_mode = #tpu.pipeline_mode<synchronous>, transform_indices = @transform_3, window_bounds = array<i64: 1, 128>}, {pipeline_mode = #tpu.pipeline_mode<synchronous>, transform_indices = @transform_4, window_bounds = array<i64: 32, 128>}, {pipeline_mode = #tpu.pipeline_mode<synchronous>, transform_indices = @transform_5, window_bounds = array<i64: 1, 128>}, {pipeline_mode = #tpu.pipeline_mode<synchronous>, transform_indices = @transform_6, window_bounds = array<i64: 1, 128>}, {transform_indices = @transform_7, window_bounds = array<i64: 1, 64, 1>}]} {
    %c0_i32 = arith.constant 0 : i32
    %0 = arith.cmpi eq, %arg1, %c0_i32 : i32
    %1 = arith.extui %0 : i1 to i32
    %c0_i32_0 = arith.constant 0 : i32
    %2 = arith.cmpi ne, %1, %c0_i32_0 : i32
    scf.if %2 {
      %cst_97 = arith.constant 0.000000e+00 : f32
      %248 = vector.broadcast %cst_97 : f32 to vector<2x8x32xf32>
      %c0_98 = arith.constant 0 : index
      %c0_99 = arith.constant 0 : index
      %c0_100 = arith.constant 0 : index
      %249 = vector.load %arg12[%c0_98, %c0_99, %c0_100] : memref<2x8x32xf32, #tpu.memory_space<vmem>>, vector<2x8x32xf32>
      tpu.vector_store %arg12[%c0_98, %c0_99, %c0_100], %248 {strides = array<i32>} : memref<2x8x32xf32, #tpu.memory_space<vmem>>, vector<2x8x32xf32>,
    } else {
    }
    %c0 = arith.constant 0 : index
    %c0_1 = arith.constant 0 : index
    %c0_2 = arith.constant 0 : index
    %3 = vector.load %arg2[%c0, %c0_1, %c0_2] : memref<8x8x32xf32, #tpu.memory_space<vmem>>, vector<8x8x32xf32>
    %4 = vector.shape_cast %3 : vector<8x8x32xf32> to vector<64x32xf32>
    %c0_3 = arith.constant 0 : index
    %c0_4 = arith.constant 0 : index
    %5 = vector.load %arg3[%c0_3, %c0_4] : memref<32x128xf32, #tpu.memory_space<vmem>>, vector<32x128xf32>
    %cst = arith.constant dense<0.000000e+00> : vector<64x128xf32>
    %6 = tpu.matmul %4, %5, %cst {dimension_numbers = #tpu.dot_dimension_numbers<[1], [0], [0], [1], [0, 0, 1, 1], [], []>} : vector<64x32xf32>, vector<32x128xf32>, vector<64x128xf32> -> vector<64x128xf32>
    %c0_5 = arith.constant 0 : index
    %c0_6 = arith.constant 0 : index
    %7 = vector.load %arg5[%c0_5, %c0_6] : memref<1x128xf32, #tpu.memory_space<vmem>>, vector<1x128xf32>
    %8 = vector.broadcast %7 : vector<1x128xf32> to vector<64x128xf32>
    %9 = arith.addf %6, %8 : vector<64x128xf32>
    %c0_7 = arith.constant 0 : index
    %c0_8 = arith.constant 0 : index
    %10 = vector.load %arg10[%c0_7, %c0_8] : memref<64x128xf32, #tpu.memory_space<vmem>>, vector<64x128xf32>
    tpu.vector_store %arg10[%c0_7, %c0_8], %9 {strides = array<i32>} : memref<64x128xf32, #tpu.memory_space<vmem>>, vector<64x128xf32>,
    %c0_9 = arith.constant 0 : index
    %c0_10 = arith.constant 0 : index
    %11 = vector.load %arg4[%c0_9, %c0_10] : memref<32x128xf32, #tpu.memory_space<vmem>>, vector<32x128xf32>
    %c0_11 = arith.constant 0 : index
    %c0_12 = arith.constant 0 : index
    %c0_13 = arith.constant 0 : index
    %12 = vector.load %arg12[%c0_11, %c0_12, %c0_13] : memref<2x8x32xf32, #tpu.memory_space<vmem>>, vector<1x8x32xf32>
    %13 = vector.shape_cast %12 : vector<1x8x32xf32> to vector<8x32xf32>
    %c1 = arith.constant 1 : index
    %c0_14 = arith.constant 0 : index
    %c0_15 = arith.constant 0 : index
    %14 = vector.load %arg12[%c1, %c0_14, %c0_15] : memref<2x8x32xf32, #tpu.memory_space<vmem>>, vector<1x8x32xf32>
    %15 = vector.shape_cast %14 : vector<1x8x32xf32> to vector<8x32xf32>
    %c0_i32_16 = arith.constant 0 : i32
    %c8_i32 = arith.constant 8 : i32
    %16 = arith.muli %c0_i32_16, %c8_i32 : i32
    %17 = tpu.assume_multiple %16, 8 : i32
    %18 = arith.index_cast %17 : i32 to index
    %c0_17 = arith.constant 0 : index
    %19 = vector.load %arg10[%18, %c0_17] : memref<64x128xf32, #tpu.memory_space<vmem>>, vector<8x128xf32>
    %cst_18 = arith.constant dense<0.000000e+00> : vector<8x128xf32>
    %20 = tpu.matmul %13, %11, %cst_18 {dimension_numbers = #tpu.dot_dimension_numbers<[1], [0], [0], [1], [0, 0, 1, 1], [], []>} : vector<8x32xf32>, vector<32x128xf32>, vector<8x128xf32> -> vector<8x128xf32>
    %21 = arith.addf %19, %20 : vector<8x128xf32>
    %cst_19 = arith.constant 0.000000e+00 : f32
    %22 = vector.broadcast %cst_19 : f32 to vector<8x128xf32>
    %23 = arith.subf %22, %21 : vector<8x128xf32>
    %24 = math.exp %23 : vector<8x128xf32>
    %cst_20 = arith.constant 1.000000e+00 : f32
    %25 = vector.broadcast %cst_20 : f32 to vector<8x128xf32>
    %26 = arith.addf %25, %24 : vector<8x128xf32>
    %cst_21 = arith.constant 1.000000e+00 : f32
    %27 = vector.broadcast %cst_21 : f32 to vector<8x128xf32>
    %28 = arith.divf %27, %26 : vector<8x128xf32>
    %29 = vector.extract_strided_slice %28 {offsets = [0, 0], sizes = [8, 32], strides = [1, 1]} : vector<8x128xf32> to vector<8x32xf32>
    %30 = vector.extract_strided_slice %28 {offsets = [0, 32], sizes = [8, 32], strides = [1, 1]} : vector<8x128xf32> to vector<8x32xf32>
    %31 = vector.extract_strided_slice %28 {offsets = [0, 96], sizes = [8, 32], strides = [1, 1]} : vector<8x128xf32> to vector<8x32xf32>
    %32 = vector.extract_strided_slice %21 {offsets = [0, 64], sizes = [8, 32], strides = [1, 1]} : vector<8x128xf32> to vector<8x32xf32>
    %33 = math.tanh %32 : vector<8x32xf32>
    %34 = arith.mulf %30, %15 : vector<8x32xf32>
    %35 = arith.mulf %29, %33 : vector<8x32xf32>
    %36 = arith.addf %34, %35 : vector<8x32xf32>
    %37 = math.tanh %36 : vector<8x32xf32>
    %38 = arith.mulf %31, %37 : vector<8x32xf32>
    %39 = arith.index_cast %17 : i32 to index
    %c0_22 = arith.constant 0 : index
    %40 = vector.load %arg11[%39, %c0_22] : memref<64x32xf32, #tpu.memory_space<vmem>>, vector<8x32xf32>
    tpu.vector_store %arg11[%39, %c0_22], %38 {strides = array<i32>} : memref<64x32xf32, #tpu.memory_space<vmem>>, vector<8x32xf32>,
    %c1_i32 = arith.constant 1 : i32
    %c8_i32_23 = arith.constant 8 : i32
    %41 = arith.muli %c1_i32, %c8_i32_23 : i32
    %42 = tpu.assume_multiple %41, 8 : i32
    %43 = arith.index_cast %42 : i32 to index
    %c0_24 = arith.constant 0 : index
    %44 = vector.load %arg10[%43, %c0_24] : memref<64x128xf32, #tpu.memory_space<vmem>>, vector<8x128xf32>
    %cst_25 = arith.constant dense<0.000000e+00> : vector<8x128xf32>
    %45 = tpu.matmul %38, %11, %cst_25 {dimension_numbers = #tpu.dot_dimension_numbers<[1], [0], [0], [1], [0, 0, 1, 1], [], []>} : vector<8x32xf32>, vector<32x128xf32>, vector<8x128xf32> -> vector<8x128xf32>
    %46 = arith.addf %44, %45 : vector<8x128xf32>
    %cst_26 = arith.constant 0.000000e+00 : f32
    %47 = vector.broadcast %cst_26 : f32 to vector<8x128xf32>
    %48 = arith.subf %47, %46 : vector<8x128xf32>
    %49 = math.exp %48 : vector<8x128xf32>
    %cst_27 = arith.constant 1.000000e+00 : f32
    %50 = vector.broadcast %cst_27 : f32 to vector<8x128xf32>
    %51 = arith.addf %50, %49 : vector<8x128xf32>
    %cst_28 = arith.constant 1.000000e+00 : f32
    %52 = vector.broadcast %cst_28 : f32 to vector<8x128xf32>
    %53 = arith.divf %52, %51 : vector<8x128xf32>
    %54 = vector.extract_strided_slice %53 {offsets = [0, 0], sizes = [8, 32], strides = [1, 1]} : vector<8x128xf32> to vector<8x32xf32>
    %55 = vector.extract_strided_slice %53 {offsets = [0, 32], sizes = [8, 32], strides = [1, 1]} : vector<8x128xf32> to vector<8x32xf32>
    %56 = vector.extract_strided_slice %53 {offsets = [0, 96], sizes = [8, 32], strides = [1, 1]} : vector<8x128xf32> to vector<8x32xf32>
    %57 = vector.extract_strided_slice %46 {offsets = [0, 64], sizes = [8, 32], strides = [1, 1]} : vector<8x128xf32> to vector<8x32xf32>
    %58 = math.tanh %57 : vector<8x32xf32>
    %59 = arith.mulf %55, %36 : vector<8x32xf32>
    %60 = arith.mulf %54, %58 : vector<8x32xf32>
    %61 = arith.addf %59, %60 : vector<8x32xf32>
    %62 = math.tanh %61 : vector<8x32xf32>
    %63 = arith.mulf %56, %62 : vector<8x32xf32>
    %64 = arith.index_cast %42 : i32 to index
    %c0_29 = arith.constant 0 : index
    %65 = vector.load %arg11[%64, %c0_29] : memref<64x32xf32, #tpu.memory_space<vmem>>, vector<8x32xf32>
    tpu.vector_store %arg11[%64, %c0_29], %63 {strides = array<i32>} : memref<64x32xf32, #tpu.memory_space<vmem>>, vector<8x32xf32>,
    %c2_i32 = arith.constant 2 : i32
    %c8_i32_30 = arith.constant 8 : i32
    %66 = arith.muli %c2_i32, %c8_i32_30 : i32
    %67 = tpu.assume_multiple %66, 8 : i32
    %68 = arith.index_cast %67 : i32 to index
    %c0_31 = arith.constant 0 : index
    %69 = vector.load %arg10[%68, %c0_31] : memref<64x128xf32, #tpu.memory_space<vmem>>, vector<8x128xf32>
    %cst_32 = arith.constant dense<0.000000e+00> : vector<8x128xf32>
    %70 = tpu.matmul %63, %11, %cst_32 {dimension_numbers = #tpu.dot_dimension_numbers<[1], [0], [0], [1], [0, 0, 1, 1], [], []>} : vector<8x32xf32>, vector<32x128xf32>, vector<8x128xf32> -> vector<8x128xf32>
    %71 = arith.addf %69, %70 : vector<8x128xf32>
    %cst_33 = arith.constant 0.000000e+00 : f32
    %72 = vector.broadcast %cst_33 : f32 to vector<8x128xf32>
    %73 = arith.subf %72, %71 : vector<8x128xf32>
    %74 = math.exp %73 : vector<8x128xf32>
    %cst_34 = arith.constant 1.000000e+00 : f32
    %75 = vector.broadcast %cst_34 : f32 to vector<8x128xf32>
    %76 = arith.addf %75, %74 : vector<8x128xf32>
    %cst_35 = arith.constant 1.000000e+00 : f32
    %77 = vector.broadcast %cst_35 : f32 to vector<8x128xf32>
    %78 = arith.divf %77, %76 : vector<8x128xf32>
    %79 = vector.extract_strided_slice %78 {offsets = [0, 0], sizes = [8, 32], strides = [1, 1]} : vector<8x128xf32> to vector<8x32xf32>
    %80 = vector.extract_strided_slice %78 {offsets = [0, 32], sizes = [8, 32], strides = [1, 1]} : vector<8x128xf32> to vector<8x32xf32>
    %81 = vector.extract_strided_slice %78 {offsets = [0, 96], sizes = [8, 32], strides = [1, 1]} : vector<8x128xf32> to vector<8x32xf32>
    %82 = vector.extract_strided_slice %71 {offsets = [0, 64], sizes = [8, 32], strides = [1, 1]} : vector<8x128xf32> to vector<8x32xf32>
    %83 = math.tanh %82 : vector<8x32xf32>
    %84 = arith.mulf %80, %61 : vector<8x32xf32>
    %85 = arith.mulf %79, %83 : vector<8x32xf32>
    %86 = arith.addf %84, %85 : vector<8x32xf32>
    %87 = math.tanh %86 : vector<8x32xf32>
    %88 = arith.mulf %81, %87 : vector<8x32xf32>
    %89 = arith.index_cast %67 : i32 to index
    %c0_36 = arith.constant 0 : index
    %90 = vector.load %arg11[%89, %c0_36] : memref<64x32xf32, #tpu.memory_space<vmem>>, vector<8x32xf32>
    tpu.vector_store %arg11[%89, %c0_36], %88 {strides = array<i32>} : memref<64x32xf32, #tpu.memory_space<vmem>>, vector<8x32xf32>,
    %c3_i32 = arith.constant 3 : i32
    %c8_i32_37 = arith.constant 8 : i32
    %91 = arith.muli %c3_i32, %c8_i32_37 : i32
    %92 = tpu.assume_multiple %91, 8 : i32
    %93 = arith.index_cast %92 : i32 to index
    %c0_38 = arith.constant 0 : index
    %94 = vector.load %arg10[%93, %c0_38] : memref<64x128xf32, #tpu.memory_space<vmem>>, vector<8x128xf32>
    %cst_39 = arith.constant dense<0.000000e+00> : vector<8x128xf32>
    %95 = tpu.matmul %88, %11, %cst_39 {dimension_numbers = #tpu.dot_dimension_numbers<[1], [0], [0], [1], [0, 0, 1, 1], [], []>} : vector<8x32xf32>, vector<32x128xf32>, vector<8x128xf32> -> vector<8x128xf32>
    %96 = arith.addf %94, %95 : vector<8x128xf32>
    %cst_40 = arith.constant 0.000000e+00 : f32
    %97 = vector.broadcast %cst_40 : f32 to vector<8x128xf32>
    %98 = arith.subf %97, %96 : vector<8x128xf32>
    %99 = math.exp %98 : vector<8x128xf32>
    %cst_41 = arith.constant 1.000000e+00 : f32
    %100 = vector.broadcast %cst_41 : f32 to vector<8x128xf32>
    %101 = arith.addf %100, %99 : vector<8x128xf32>
    %cst_42 = arith.constant 1.000000e+00 : f32
    %102 = vector.broadcast %cst_42 : f32 to vector<8x128xf32>
    %103 = arith.divf %102, %101 : vector<8x128xf32>
    %104 = vector.extract_strided_slice %103 {offsets = [0, 0], sizes = [8, 32], strides = [1, 1]} : vector<8x128xf32> to vector<8x32xf32>
    %105 = vector.extract_strided_slice %103 {offsets = [0, 32], sizes = [8, 32], strides = [1, 1]} : vector<8x128xf32> to vector<8x32xf32>
    %106 = vector.extract_strided_slice %103 {offsets = [0, 96], sizes = [8, 32], strides = [1, 1]} : vector<8x128xf32> to vector<8x32xf32>
    %107 = vector.extract_strided_slice %96 {offsets = [0, 64], sizes = [8, 32], strides = [1, 1]} : vector<8x128xf32> to vector<8x32xf32>
    %108 = math.tanh %107 : vector<8x32xf32>
    %109 = arith.mulf %105, %86 : vector<8x32xf32>
    %110 = arith.mulf %104, %108 : vector<8x32xf32>
    %111 = arith.addf %109, %110 : vector<8x32xf32>
    %112 = math.tanh %111 : vector<8x32xf32>
    %113 = arith.mulf %106, %112 : vector<8x32xf32>
    %114 = arith.index_cast %92 : i32 to index
    %c0_43 = arith.constant 0 : index
    %115 = vector.load %arg11[%114, %c0_43] : memref<64x32xf32, #tpu.memory_space<vmem>>, vector<8x32xf32>
    tpu.vector_store %arg11[%114, %c0_43], %113 {strides = array<i32>} : memref<64x32xf32, #tpu.memory_space<vmem>>, vector<8x32xf32>,
    %c4_i32 = arith.constant 4 : i32
    %c8_i32_44 = arith.constant 8 : i32
    %116 = arith.muli %c4_i32, %c8_i32_44 : i32
    %117 = tpu.assume_multiple %116, 8 : i32
    %118 = arith.index_cast %117 : i32 to index
    %c0_45 = arith.constant 0 : index
    %119 = vector.load %arg10[%118, %c0_45] : memref<64x128xf32, #tpu.memory_space<vmem>>, vector<8x128xf32>
    %cst_46 = arith.constant dense<0.000000e+00> : vector<8x128xf32>
    %120 = tpu.matmul %113, %11, %cst_46 {dimension_numbers = #tpu.dot_dimension_numbers<[1], [0], [0], [1], [0, 0, 1, 1], [], []>} : vector<8x32xf32>, vector<32x128xf32>, vector<8x128xf32> -> vector<8x128xf32>
    %121 = arith.addf %119, %120 : vector<8x128xf32>
    %cst_47 = arith.constant 0.000000e+00 : f32
    %122 = vector.broadcast %cst_47 : f32 to vector<8x128xf32>
    %123 = arith.subf %122, %121 : vector<8x128xf32>
    %124 = math.exp %123 : vector<8x128xf32>
    %cst_48 = arith.constant 1.000000e+00 : f32
    %125 = vector.broadcast %cst_48 : f32 to vector<8x128xf32>
    %126 = arith.addf %125, %124 : vector<8x128xf32>
    %cst_49 = arith.constant 1.000000e+00 : f32
    %127 = vector.broadcast %cst_49 : f32 to vector<8x128xf32>
    %128 = arith.divf %127, %126 : vector<8x128xf32>
    %129 = vector.extract_strided_slice %128 {offsets = [0, 0], sizes = [8, 32], strides = [1, 1]} : vector<8x128xf32> to vector<8x32xf32>
    %130 = vector.extract_strided_slice %128 {offsets = [0, 32], sizes = [8, 32], strides = [1, 1]} : vector<8x128xf32> to vector<8x32xf32>
    %131 = vector.extract_strided_slice %128 {offsets = [0, 96], sizes = [8, 32], strides = [1, 1]} : vector<8x128xf32> to vector<8x32xf32>
    %132 = vector.extract_strided_slice %121 {offsets = [0, 64], sizes = [8, 32], strides = [1, 1]} : vector<8x128xf32> to vector<8x32xf32>
    %133 = math.tanh %132 : vector<8x32xf32>
    %134 = arith.mulf %130, %111 : vector<8x32xf32>
    %135 = arith.mulf %129, %133 : vector<8x32xf32>
    %136 = arith.addf %134, %135 : vector<8x32xf32>
    %137 = math.tanh %136 : vector<8x32xf32>
    %138 = arith.mulf %131, %137 : vector<8x32xf32>
    %139 = arith.index_cast %117 : i32 to index
    %c0_50 = arith.constant 0 : index
    %140 = vector.load %arg11[%139, %c0_50] : memref<64x32xf32, #tpu.memory_space<vmem>>, vector<8x32xf32>
    tpu.vector_store %arg11[%139, %c0_50], %138 {strides = array<i32>} : memref<64x32xf32, #tpu.memory_space<vmem>>, vector<8x32xf32>,
    %c5_i32 = arith.constant 5 : i32
    %c8_i32_51 = arith.constant 8 : i32
    %141 = arith.muli %c5_i32, %c8_i32_51 : i32
    %142 = tpu.assume_multiple %141, 8 : i32
    %143 = arith.index_cast %142 : i32 to index
    %c0_52 = arith.constant 0 : index
    %144 = vector.load %arg10[%143, %c0_52] : memref<64x128xf32, #tpu.memory_space<vmem>>, vector<8x128xf32>
    %cst_53 = arith.constant dense<0.000000e+00> : vector<8x128xf32>
    %145 = tpu.matmul %138, %11, %cst_53 {dimension_numbers = #tpu.dot_dimension_numbers<[1], [0], [0], [1], [0, 0, 1, 1], [], []>} : vector<8x32xf32>, vector<32x128xf32>, vector<8x128xf32> -> vector<8x128xf32>
    %146 = arith.addf %144, %145 : vector<8x128xf32>
    %cst_54 = arith.constant 0.000000e+00 : f32
    %147 = vector.broadcast %cst_54 : f32 to vector<8x128xf32>
    %148 = arith.subf %147, %146 : vector<8x128xf32>
    %149 = math.exp %148 : vector<8x128xf32>
    %cst_55 = arith.constant 1.000000e+00 : f32
    %150 = vector.broadcast %cst_55 : f32 to vector<8x128xf32>
    %151 = arith.addf %150, %149 : vector<8x128xf32>
    %cst_56 = arith.constant 1.000000e+00 : f32
    %152 = vector.broadcast %cst_56 : f32 to vector<8x128xf32>
    %153 = arith.divf %152, %151 : vector<8x128xf32>
    %154 = vector.extract_strided_slice %153 {offsets = [0, 0], sizes = [8, 32], strides = [1, 1]} : vector<8x128xf32> to vector<8x32xf32>
    %155 = vector.extract_strided_slice %153 {offsets = [0, 32], sizes = [8, 32], strides = [1, 1]} : vector<8x128xf32> to vector<8x32xf32>
    %156 = vector.extract_strided_slice %153 {offsets = [0, 96], sizes = [8, 32], strides = [1, 1]} : vector<8x128xf32> to vector<8x32xf32>
    %157 = vector.extract_strided_slice %146 {offsets = [0, 64], sizes = [8, 32], strides = [1, 1]} : vector<8x128xf32> to vector<8x32xf32>
    %158 = math.tanh %157 : vector<8x32xf32>
    %159 = arith.mulf %155, %136 : vector<8x32xf32>
    %160 = arith.mulf %154, %158 : vector<8x32xf32>
    %161 = arith.addf %159, %160 : vector<8x32xf32>
    %162 = math.tanh %161 : vector<8x32xf32>
    %163 = arith.mulf %156, %162 : vector<8x32xf32>
    %164 = arith.index_cast %142 : i32 to index
    %c0_57 = arith.constant 0 : index
    %165 = vector.load %arg11[%164, %c0_57] : memref<64x32xf32, #tpu.memory_space<vmem>>, vector<8x32xf32>
    tpu.vector_store %arg11[%164, %c0_57], %163 {strides = array<i32>} : memref<64x32xf32, #tpu.memory_space<vmem>>, vector<8x32xf32>,
    %c6_i32 = arith.constant 6 : i32
    %c8_i32_58 = arith.constant 8 : i32
    %166 = arith.muli %c6_i32, %c8_i32_58 : i32
    %167 = tpu.assume_multiple %166, 8 : i32
    %168 = arith.index_cast %167 : i32 to index
    %c0_59 = arith.constant 0 : index
    %169 = vector.load %arg10[%168, %c0_59] : memref<64x128xf32, #tpu.memory_space<vmem>>, vector<8x128xf32>
    %cst_60 = arith.constant dense<0.000000e+00> : vector<8x128xf32>
    %170 = tpu.matmul %163, %11, %cst_60 {dimension_numbers = #tpu.dot_dimension_numbers<[1], [0], [0], [1], [0, 0, 1, 1], [], []>} : vector<8x32xf32>, vector<32x128xf32>, vector<8x128xf32> -> vector<8x128xf32>
    %171 = arith.addf %169, %170 : vector<8x128xf32>
    %cst_61 = arith.constant 0.000000e+00 : f32
    %172 = vector.broadcast %cst_61 : f32 to vector<8x128xf32>
    %173 = arith.subf %172, %171 : vector<8x128xf32>
    %174 = math.exp %173 : vector<8x128xf32>
    %cst_62 = arith.constant 1.000000e+00 : f32
    %175 = vector.broadcast %cst_62 : f32 to vector<8x128xf32>
    %176 = arith.addf %175, %174 : vector<8x128xf32>
    %cst_63 = arith.constant 1.000000e+00 : f32
    %177 = vector.broadcast %cst_63 : f32 to vector<8x128xf32>
    %178 = arith.divf %177, %176 : vector<8x128xf32>
    %179 = vector.extract_strided_slice %178 {offsets = [0, 0], sizes = [8, 32], strides = [1, 1]} : vector<8x128xf32> to vector<8x32xf32>
    %180 = vector.extract_strided_slice %178 {offsets = [0, 32], sizes = [8, 32], strides = [1, 1]} : vector<8x128xf32> to vector<8x32xf32>
    %181 = vector.extract_strided_slice %178 {offsets = [0, 96], sizes = [8, 32], strides = [1, 1]} : vector<8x128xf32> to vector<8x32xf32>
    %182 = vector.extract_strided_slice %171 {offsets = [0, 64], sizes = [8, 32], strides = [1, 1]} : vector<8x128xf32> to vector<8x32xf32>
    %183 = math.tanh %182 : vector<8x32xf32>
    %184 = arith.mulf %180, %161 : vector<8x32xf32>
    %185 = arith.mulf %179, %183 : vector<8x32xf32>
    %186 = arith.addf %184, %185 : vector<8x32xf32>
    %187 = math.tanh %186 : vector<8x32xf32>
    %188 = arith.mulf %181, %187 : vector<8x32xf32>
    %189 = arith.index_cast %167 : i32 to index
    %c0_64 = arith.constant 0 : index
    %190 = vector.load %arg11[%189, %c0_64] : memref<64x32xf32, #tpu.memory_space<vmem>>, vector<8x32xf32>
    tpu.vector_store %arg11[%189, %c0_64], %188 {strides = array<i32>} : memref<64x32xf32, #tpu.memory_space<vmem>>, vector<8x32xf32>,
    %c7_i32 = arith.constant 7 : i32
    %c8_i32_65 = arith.constant 8 : i32
    %191 = arith.muli %c7_i32, %c8_i32_65 : i32
    %192 = tpu.assume_multiple %191, 8 : i32
    %193 = arith.index_cast %192 : i32 to index
    %c0_66 = arith.constant 0 : index
    %194 = vector.load %arg10[%193, %c0_66] : memref<64x128xf32, #tpu.memory_space<vmem>>, vector<8x128xf32>
    %cst_67 = arith.constant dense<0.000000e+00> : vector<8x128xf32>
    %195 = tpu.matmul %188, %11, %cst_67 {dimension_numbers = #tpu.dot_dimension_numbers<[1], [0], [0], [1], [0, 0, 1, 1], [], []>} : vector<8x32xf32>, vector<32x128xf32>, vector<8x128xf32> -> vector<8x128xf32>
    %196 = arith.addf %194, %195 : vector<8x128xf32>
    %cst_68 = arith.constant 0.000000e+00 : f32
    %197 = vector.broadcast %cst_68 : f32 to vector<8x128xf32>
    %198 = arith.subf %197, %196 : vector<8x128xf32>
    %199 = math.exp %198 : vector<8x128xf32>
    %cst_69 = arith.constant 1.000000e+00 : f32
    %200 = vector.broadcast %cst_69 : f32 to vector<8x128xf32>
    %201 = arith.addf %200, %199 : vector<8x128xf32>
    %cst_70 = arith.constant 1.000000e+00 : f32
    %202 = vector.broadcast %cst_70 : f32 to vector<8x128xf32>
    %203 = arith.divf %202, %201 : vector<8x128xf32>
    %204 = vector.extract_strided_slice %203 {offsets = [0, 0], sizes = [8, 32], strides = [1, 1]} : vector<8x128xf32> to vector<8x32xf32>
    %205 = vector.extract_strided_slice %203 {offsets = [0, 32], sizes = [8, 32], strides = [1, 1]} : vector<8x128xf32> to vector<8x32xf32>
    %206 = vector.extract_strided_slice %203 {offsets = [0, 96], sizes = [8, 32], strides = [1, 1]} : vector<8x128xf32> to vector<8x32xf32>
    %207 = vector.extract_strided_slice %196 {offsets = [0, 64], sizes = [8, 32], strides = [1, 1]} : vector<8x128xf32> to vector<8x32xf32>
    %208 = math.tanh %207 : vector<8x32xf32>
    %209 = arith.mulf %205, %186 : vector<8x32xf32>
    %210 = arith.mulf %204, %208 : vector<8x32xf32>
    %211 = arith.addf %209, %210 : vector<8x32xf32>
    %212 = math.tanh %211 : vector<8x32xf32>
    %213 = arith.mulf %206, %212 : vector<8x32xf32>
    %214 = arith.index_cast %192 : i32 to index
    %c0_71 = arith.constant 0 : index
    %215 = vector.load %arg11[%214, %c0_71] : memref<64x32xf32, #tpu.memory_space<vmem>>, vector<8x32xf32>
    tpu.vector_store %arg11[%214, %c0_71], %213 {strides = array<i32>} : memref<64x32xf32, #tpu.memory_space<vmem>>, vector<8x32xf32>,
    %c8_i32_72 = arith.constant 8 : i32
    %c0_73 = arith.constant 0 : index
    %c0_74 = arith.constant 0 : index
    %c0_75 = arith.constant 0 : index
    %216 = vector.load %arg12[%c0_73, %c0_74, %c0_75] : memref<2x8x32xf32, #tpu.memory_space<vmem>>, vector<1x8x32xf32>
    %217 = vector.shape_cast %216 : vector<1x8x32xf32> to vector<8x32xf32>
    %218 = vector.shape_cast %213 : vector<8x32xf32> to vector<1x8x32xf32>
    tpu.vector_store %arg12[%c0_73, %c0_74, %c0_75], %218 {strides = array<i32>} : memref<2x8x32xf32, #tpu.memory_space<vmem>>, vector<1x8x32xf32>,
    %c1_76 = arith.constant 1 : index
    %c0_77 = arith.constant 0 : index
    %c0_78 = arith.constant 0 : index
    %219 = vector.load %arg12[%c1_76, %c0_77, %c0_78] : memref<2x8x32xf32, #tpu.memory_space<vmem>>, vector<1x8x32xf32>
    %220 = vector.shape_cast %219 : vector<1x8x32xf32> to vector<8x32xf32>
    %221 = vector.shape_cast %211 : vector<8x32xf32> to vector<1x8x32xf32>
    tpu.vector_store %arg12[%c1_76, %c0_77, %c0_78], %221 {strides = array<i32>} : memref<2x8x32xf32, #tpu.memory_space<vmem>>, vector<1x8x32xf32>,
    %c0_79 = arith.constant 0 : index
    %c0_80 = arith.constant 0 : index
    %222 = vector.load %arg11[%c0_79, %c0_80] : memref<64x32xf32, #tpu.memory_space<vmem>>, vector<64x32xf32>
    %c0_81 = arith.constant 0 : index
    %c0_82 = arith.constant 0 : index
    %223 = vector.load %arg6[%c0_81, %c0_82] : memref<32x128xf32, #tpu.memory_space<vmem>>, vector<32x128xf32>
    %cst_83 = arith.constant dense<0.000000e+00> : vector<64x128xf32>
    %224 = tpu.matmul %222, %223, %cst_83 {dimension_numbers = #tpu.dot_dimension_numbers<[1], [0], [0], [1], [0, 0, 1, 1], [], []>} : vector<64x32xf32>, vector<32x128xf32>, vector<64x128xf32> -> vector<64x128xf32>
    %c0_84 = arith.constant 0 : index
    %c0_85 = arith.constant 0 : index
    %225 = vector.load %arg7[%c0_84, %c0_85] : memref<1x128xf32, #tpu.memory_space<vmem>>, vector<1x128xf32>
    %226 = vector.broadcast %225 : vector<1x128xf32> to vector<64x128xf32>
    %227 = arith.addf %224, %226 : vector<64x128xf32>
    %cst_86 = arith.constant 0.000000e+00 : f32
    %228 = vector.broadcast %cst_86 : f32 to vector<64x128xf32>
    %229 = arith.cmpf oge, %227, %228 : vector<64x128xf32>
    %cst_87 = arith.constant 0.00999999977 : f32
    %230 = vector.broadcast %cst_87 : f32 to vector<64x128xf32>
    %231 = arith.mulf %230, %227 : vector<64x128xf32>
    %232 = arith.select %229, %227, %231 : vector<64x128xi1>, vector<64x128xf32>
    %c0_88 = arith.constant 0 : index
    %c0_89 = arith.constant 0 : index
    %233 = vector.load %arg8[%c0_88, %c0_89] : memref<1x128xf32, #tpu.memory_space<vmem>>, vector<1x128xf32>
    %234 = vector.broadcast %233 : vector<1x128xf32> to vector<64x128xf32>
    %235 = arith.mulf %232, %234 : vector<64x128xf32>
    %cst_90 = arith.constant dense<0.000000e+00> : vector<64xf32>
    %236 = vector.multi_reduction <add>, %235, %cst_90 [1] : vector<64x128xf32> to vector<64xf32>
    %237 = vector.shape_cast %236 : vector<64xf32> to vector<64x1xf32>
    %cst_91 = arith.constant 0.000000e+00 : f32
    %238 = vector.broadcast %cst_91 : f32 to vector<64x1xf32>
    %239 = arith.subf %238, %237 : vector<64x1xf32>
    %240 = math.exp %239 : vector<64x1xf32>
    %cst_92 = arith.constant 1.000000e+00 : f32
    %241 = vector.broadcast %cst_92 : f32 to vector<64x1xf32>
    %242 = arith.addf %241, %240 : vector<64x1xf32>
    %cst_93 = arith.constant 1.000000e+00 : f32
    %243 = vector.broadcast %cst_93 : f32 to vector<64x1xf32>
    %244 = arith.divf %243, %242 : vector<64x1xf32>
    %c0_94 = arith.constant 0 : index
    %c0_95 = arith.constant 0 : index
    %c0_96 = arith.constant 0 : index
    %245 = vector.load %arg9[%c0_94, %c0_95, %c0_96] : memref<1x64x1xf32, #tpu.memory_space<vmem>>, vector<1x64x1xf32>
    %246 = vector.shape_cast %245 : vector<1x64x1xf32> to vector<64x1xf32>
    %247 = vector.shape_cast %244 : vector<64x1xf32> to vector<1x64x1xf32>
    tpu.vector_store %arg9[%c0_94, %c0_95, %c0_96], %247 {strides = array<i32>} : memref<1x64x1xf32, #tpu.memory_space<vmem>>, vector<1x64x1xf32>,
    return
  }
  func.func @transform_0(%arg0: i32, %arg1: i32) -> (i32, i32, i32) {
    %c0_i32 = arith.constant 0 : i32
    %c0_i32_0 = arith.constant 0 : i32
    return %arg1, %arg0, %c0_i32 : i32, i32, i32
  }
  func.func @transform_1(%arg0: i32, %arg1: i32) -> (i32, i32) {
    %c0_i32 = arith.constant 0 : i32
    %c0_i32_0 = arith.constant 0 : i32
    %c0_i32_1 = arith.constant 0 : i32
    return %c0_i32, %c0_i32_0 : i32, i32
  }
  func.func @transform_2(%arg0: i32, %arg1: i32) -> (i32, i32) {
    %c0_i32 = arith.constant 0 : i32
    %c0_i32_0 = arith.constant 0 : i32
    %c0_i32_1 = arith.constant 0 : i32
    return %c0_i32, %c0_i32_0 : i32, i32
  }
  func.func @transform_3(%arg0: i32, %arg1: i32) -> (i32, i32) {
    %c0_i32 = arith.constant 0 : i32
    %c0_i32_0 = arith.constant 0 : i32
    %c0_i32_1 = arith.constant 0 : i32
    return %c0_i32, %c0_i32_0 : i32, i32
  }
  func.func @transform_4(%arg0: i32, %arg1: i32) -> (i32, i32) {
    %c0_i32 = arith.constant 0 : i32
    %c0_i32_0 = arith.constant 0 : i32
    %c0_i32_1 = arith.constant 0 : i32
    return %c0_i32, %c0_i32_0 : i32, i32
  }
  func.func @transform_5(%arg0: i32, %arg1: i32) -> (i32, i32) {
    %c0_i32 = arith.constant 0 : i32
    %c0_i32_0 = arith.constant 0 : i32
    %c0_i32_1 = arith.constant 0 : i32
    return %c0_i32, %c0_i32_0 : i32, i32
  }
  func.func @transform_6(%arg0: i32, %arg1: i32) -> (i32, i32) {
    %c0_i32 = arith.constant 0 : i32
    %c0_i32_0 = arith.constant 0 : i32
    %c0_i32_1 = arith.constant 0 : i32
    return %c0_i32, %c0_i32_0 : i32, i32
  }
  func.func @transform_7(%arg0: i32, %arg1: i32) -> (i32, i32, i32) {
    %c0_i32 = arith.constant 0 : i32
    %c0_i32_0 = arith.constant 0 : i32
    return %arg0, %arg1, %c0_i32 : i32, i32, i32
  }
}

</mosaic_0001>

<llo_original>
// kernel: squeeze.5
$region0: #{squeeze.5}
  %s0 = inlined_call_operand.vmem [shape: f32[64], index: 0, kind: input, shape index: {}]
  %s1 = inlined_call_operand.vmem [shape: f32[1,8,8], index: 1, kind: output, shape index: {}]
  $region1: #{squeeze.5} parent=0
    #allocation0 [shape = 'u8[4096]{0}', space=vmem, size = 0x1000, scoped, tag = 'scoped mem for input reshape']
    %s3 = sshll.u32 1, 1
    %s4 = ssub.s32 %s3, 1
    %v5 = vld [vmem:[%s0] sm:%s4]
    %6 = vst [vmem:[#allocation0] sm:%s4] %v5
    %v7 = vld [vmem:[#allocation0] sm:$0x1]
    %vm8 = vcmask 64512
    %9 = vst.msk [vmem:[%s1] sm:$0x1] %vm8, %v7
    %v10 = vld [vmem:[#allocation0] sm:$0x1]
    %11 = vrot.lane.b32.xlu0 %v10, 120
    %v12 = vpop.permute.xlu0 %11
    %vm13 = vcmask 64512
    %s14 = scalar_lea.vmem %s1, 1
    %15 = vst.msk [vmem:[%s14] sm:$0x1] %vm13, %v12
    %v16 = vld [vmem:[#allocation0] sm:$0x1]
    %17 = vrot.lane.b32.xlu0 %v16, 112
    %v18 = vpop.permute.xlu0 %17
    %vm19 = vcmask 64512
    %s20 = scalar_lea.vmem %s1, 2
    %21 = vst.msk [vmem:[%s20] sm:$0x1] %vm19, %v18
    %v22 = vld [vmem:[#allocation0] sm:$0x1]
    %23 = vrot.lane.b32.xlu0 %v22, 104
    %v24 = vpop.permute.xlu0 %23
    %vm25 = vcmask 64512
    %s26 = scalar_lea.vmem %s1, 3
    %27 = vst.msk [vmem:[%s26] sm:$0x1] %vm25, %v24
    %v28 = vld [vmem:[#allocation0] sm:$0x1]
    %29 = vrot.lane.b32.xlu0 %v28, 96
    %v30 = vpop.permute.xlu0 %29
    %vm31 = vcmask 64512
    %s32 = scalar_lea.vmem %s1, 4
    %33 = vst.msk [vmem:[%s32] sm:$0x1] %vm31, %v30
    %v34 = vld [vmem:[#allocation0] sm:$0x1]
    %35 = vrot.lane.b32.xlu0 %v34, 88
    %v36 = vpop.permute.xlu0 %35
    %vm37 = vcmask 64512
    %s38 = scalar_lea.vmem %s1, 5
    %39 = vst.msk [vmem:[%s38] sm:$0x1] %vm37, %v36
    %v40 = vld [vmem:[#allocation0] sm:$0x1]
    %41 = vrot.lane.b32.xlu0 %v40, 80
    %v42 = vpop.permute.xlu0 %41
    %vm43 = vcmask 64512
    %s44 = scalar_lea.vmem %s1, 6
    %45 = vst.msk [vmem:[%s44] sm:$0x1] %vm43, %v42
    %v46 = vld [vmem:[#allocation0] sm:$0x1]
    %47 = vrot.lane.b32.xlu0 %v46, 72
    %v48 = vpop.permute.xlu0 %47
    %vm49 = vcmask 64512
    %s50 = scalar_lea.vmem %s1, 7
    %51 = vst.msk [vmem:[%s50] sm:$0x1] %vm49, %v48

// kernel: binary_lstm_forward.1
$region0: #{binary_lstm_forward.1}
  #allocation0 [shape = 'u32[]', space=smem, size = 0x4, offset = 0x4, fixed_abs, tag = 'smem constant byte address 0x4 - core index']
  #allocation1 [shape = 'u32[144,128]{1,0:T(1,128)}', space=vmem, size = 0x12000, scoped, tag = 'internal scratch']
  #allocation2 [shape = 'f32[64,128]{1,0:T(8,128)}', space=vmem, size = 0x8000, scoped, tag = 'scratch operand']
  #allocation3 [shape = 'f32[64,32]{1,0:T(8,128)}', space=vmem, size = 0x8000, scoped, tag = 'scratch operand']
  #allocation4 [shape = 'f32[2,8,32]{2,1,0:T(8,128)}', space=vmem, size = 0x2000, scoped, tag = 'scratch operand']
  %s0 = inlined_call_operand.vmem [shape: f32[8,8,32], index: 0, kind: input, shape index: {}]
  %s1 = inlined_call_operand.vmem [shape: f32[32,128], index: 1, kind: input, shape index: {}]
  %s2 = inlined_call_operand.vmem [shape: f32[32,128], index: 2, kind: input, shape index: {}]
  %s3 = inlined_call_operand.vmem [shape: f32[1,128], index: 3, kind: input, shape index: {}]
  %s4 = inlined_call_operand.vmem [shape: f32[32,128], index: 4, kind: input, shape index: {}]
  %s5 = inlined_call_operand.vmem [shape: f32[1,128], index: 5, kind: input, shape index: {}]
  %s6 = inlined_call_operand.vmem [shape: f32[1,128], index: 6, kind: input, shape index: {}]
  %s7 = inlined_call_operand.vmem [shape: f32[1,64,1], index: 7, kind: output, shape index: {}]
  %s8 = sld [smem:[#allocation0]]
  $region42: #{binary_lstm_forward.1} parent=0
    _
  %s10 = ssub.s32 1, %s8
  %s11 = scalar_select 0, %s10, %s8
  // Predicated region
  $region2: #{binary_lstm_forward.1} parent=0 // pred_check
    _
  $region3: #{binary_lstm_forward.1} parent=0 // pred_check_branch
    %13 = sbr.rel (0) target = $region5
  $region4: #{binary_lstm_forward.1} parent=0 // pred_region
    _
  $region5: #{binary_lstm_forward.1} parent=0 // pred_fallthru
    _
  // Predicated region
  $region6: #{binary_lstm_forward.1} parent=0 // pred_check
    _
  $region7: #{binary_lstm_forward.1} parent=0 // pred_check_branch
    %15 = sbr.rel (0) target = $region9
  $region8: #{binary_lstm_forward.1} parent=0 // pred_region
    _
  $region9: #{binary_lstm_forward.1} parent=0 // pred_fallthru
    _
  // Predicated region
  $region10: #{binary_lstm_forward.1} parent=0 // pred_check
    _
  $region11: #{binary_lstm_forward.1} parent=0 // pred_check_branch
    %17 = sbr.rel (0) target = $region13
  $region12: #{binary_lstm_forward.1} parent=0 // pred_region
    _
  $region13: #{binary_lstm_forward.1} parent=0 // pred_fallthru
    _
  // Predicated region
  $region14: #{binary_lstm_forward.1} parent=0 // pred_check
    _
  $region15: #{binary_lstm_forward.1} parent=0 // pred_check_branch
    %19 = sbr.rel (0) target = $region17
  $region16: #{binary_lstm_forward.1} parent=0 // pred_region
    _
  $region17: #{binary_lstm_forward.1} parent=0 // pred_fallthru
    _
  // Predicated region
  $region18: #{binary_lstm_forward.1} parent=0 // pred_check
    _
  $region19: #{binary_lstm_forward.1} parent=0 // pred_check_branch
    %21 = sbr.rel (0) target = $region21
  $region20: #{binary_lstm_forward.1} parent=0 // pred_region
    _
  $region21: #{binary_lstm_forward.1} parent=0 // pred_fallthru
    _
  // Predicated region
  $region22: #{binary_lstm_forward.1} parent=0 // pred_check
    _
  $region23: #{binary_lstm_forward.1} parent=0 // pred_check_branch
    %23 = sbr.rel (0) target = $region25
  $region24: #{binary_lstm_forward.1} parent=0 // pred_region
    _
  $region25: #{binary_lstm_forward.1} parent=0 // pred_fallthru
    _
  // Predicated region
  $region26: #{binary_lstm_forward.1} parent=0 // pred_check
    _
  $region27: #{binary_lstm_forward.1} parent=0 // pred_check_branch
    %25 = sbr.rel (0) target = $region29
  $region28: #{binary_lstm_forward.1} parent=0 // pred_region
    _
  $region29: #{binary_lstm_forward.1} parent=0 // pred_fallthru
    _
  %p26 = scmp.eq.s32.totalorder 0, 0
  // Predicated region
  $region30: #{binary_lstm_forward.1} parent=0 // pred_check
    %p27 = pneg %p26
  $region31: #{binary_lstm_forward.1} parent=0 // pred_check_branch
    %29 = sbr.rel (%p27) target = $region33
  $region32: #{binary_lstm_forward.1} parent=0 // pred_region
    %vm30 = vcmask 261120
    %31 = vst.msk [vmem:[#allocation4] sm:$0xff] %vm30, 0.0
    %32 = vst.msk [vmem:[#allocation4 + $0x8] sm:$0xff] %vm30, 0.0
  $region33: #{binary_lstm_forward.1} parent=0 // pred_fallthru
    _
  %v33 = vld [vmem:[%s0] sm:$0xff]
  %v34 = vld [vmem:[%s0 + $0x8] sm:$0xff]
  %v35 = vld [vmem:[%s0 + $0x10] sm:$0xff]
  %v36 = vld [vmem:[%s0 + $0x18] sm:$0xff]
  %v37 = vld [vmem:[%s0 + $0x20] sm:$0xff]
  %v38 = vld [vmem:[%s0 + $0x28] sm:$0xff]
  %v39 = vld [vmem:[%s0 + $0x30] sm:$0xff]
  %v40 = vld [vmem:[%s0 + $0x38] sm:$0xff]
  %v41 = vld [vmem:[%s1] sm:$0xff]
  %v42 = vld [vmem:[%s1 + $0x8] sm:$0xff]
  %v43 = vld [vmem:[%s1 + $0x10] sm:$0xff]
  %v44 = vld [vmem:[%s1 + $0x18] sm:$0xff]
  %v45 = vld [vmem:[%s3] sm:$0x1]
  %v47 = vlaneseq
  %v48 = vshrl.u32 %v47, 7
  %v49 = vsub.s32 0, %v48
  %v50 = vrot.slane %v45, %v49
  %vm52 = vcmask 261120
  %v54 = vsel %vm52, %v33, 0
  %v57 = vsel %vm52, %v34, 0
  %v60 = vsel %vm52, %v35, 0
  %v63 = vsel %vm52, %v36, 0
  %v66 = vsel %vm52, %v37, 0
  %v69 = vsel %vm52, %v38, 0
  %v72 = vsel %vm52, %v39, 0
  %v75 = vsel %vm52, %v40, 0
  %77 = vmatprep.subr.mxu0 0.0
  %78 = vmatpush1.msra.mxu0 0.0
  %79 = vmatprep.subr.mxu0 0.0
  %80 = vmatpush1.msra.mxu0 0.0
  %81 = vmatprep.subr.mxu0 0.0
  %82 = vmatpush1.msra.mxu0 0.0
  %83 = vmatprep.subr.mxu0 0.0
  %84 = vmatpush1.msra.mxu0 0.0
  %85 = vmatprep.subr.mxu0 0.0
  %86 = vmatpush1.msra.mxu0 0.0
  %87 = vmatprep.subr.mxu0 0.0
  %88 = vmatpush1.msra.mxu0 0.0
  %89 = vmatprep.subr.mxu0 0.0
  %90 = vmatpush1.msra.mxu0 0.0
  %91 = vmatprep.subr.mxu0 0.0
  %92 = vmatpush1.msra.mxu0 0.0
  %93 = vmatprep.subr.mxu0 0.0
  %94 = vmatpush1.msra.mxu0 0.0
  %95 = vmatprep.subr.mxu0 0.0
  %96 = vmatpush1.msra.mxu0 0.0
  %97 = vmatprep.subr.mxu0 0.0
  %98 = vmatpush1.msra.mxu0 0.0
  %99 = vmatprep.subr.mxu0 0.0
  %100 = vmatpush1.msra.mxu0 0.0
  %101 = vmatprep.subr.mxu0 0.0
  %102 = vmatpush1.msra.mxu0 %v44
  %103 = vmatprep.subr.mxu0 0.0
  %104 = vmatpush1.msra.mxu0 %v43
  %105 = vmatprep.subr.mxu0 0.0
  %106 = vmatpush1.msra.mxu0 %v42
  %107 = vmatprep.subr.mxu0 0.0
  %108 = vmatpush1.msra.mxu0 %v41
  %109 = vmatprep.subr.mxu0 0.0
  %110 = vmatpush2.msra.mxu0 0.0
  %111 = vmatprep.subr.mxu0 0.0
  %112 = vmatpush2.msra.mxu0 0.0
  %113 = vmatprep.subr.mxu0 0.0
  %114 = vmatpush2.msra.mxu0 0.0
  %115 = vmatprep.subr.mxu0 0.0
  %116 = vmatpush2.msra.mxu0 0.0
  %117 = vmatprep.subr.mxu0 0.0
  %118 = vmatpush2.msra.mxu0 0.0
  %119 = vmatprep.subr.mxu0 0.0
  %120 = vmatpush2.msra.mxu0 0.0
  %121 = vmatprep.subr.mxu0 0.0
  %122 = vmatpush2.msra.mxu0 0.0
  %123 = vmatprep.subr.mxu0 0.0
  %124 = vmatpush2.msra.mxu0 0.0
  %125 = vmatprep.subr.mxu0 0.0
  %126 = vmatpush2.msra.mxu0 0.0
  %127 = vmatprep.subr.mxu0 0.0
  %128 = vmatpush2.msra.mxu0 0.0
  %129 = vmatprep.subr.mxu0 0.0
  %130 = vmatpush2.msra.mxu0 0.0
  %131 = vmatprep.subr.mxu0 0.0
  %132 = vmatpush2.msra.mxu0 0.0
  %133 = vmatprep.subr.mxu0 0.0
  %134 = vmatpush2.msra.mxu0 0.0
  %135 = vmatprep.subr.mxu0 0.0
  %136 = vmatpush2.msra.mxu0 0.0
  %137 = vmatprep.subr.mxu0 0.0
  %138 = vmatpush2.msra.mxu0 0.0
  %139 = vmatprep.subr.mxu0 0.0
  %140 = vmatpush2.msra.mxu0 0.0
  %141 = vmatprep.mubr.f32.mxu0 0.0
  %142 = vmatmul.mubr.f32.gmra.mxu0 %v54
  %v143 = vpop.f32.mrf.mxu0
  %v144 = vadd.f32 %v50, %v143
  %v145 = vpop.f32.mrf.mxu0
  %146 = vmatprep.mubr.f32.mxu0 0.0
  %147 = vmatmul.mubr.f32.gmra.mxu0 %v57
  %v148 = vpop.f32.mrf.mxu0
  %v149 = vadd.f32 %v50, %v148
  %v150 = vpop.f32.mrf.mxu0
  %151 = vmatprep.mubr.f32.mxu0 0.0
  %152 = vmatmul.mubr.f32.gmra.mxu0 %v60
  %v153 = vpop.f32.mrf.mxu0
  %v154 = vadd.f32 %v50, %v153
  %v155 = vpop.f32.mrf.mxu0
  %156 = vmatprep.mubr.f32.mxu0 0.0
  %157 = vmatmul.mubr.f32.gmra.mxu0 %v63
  %v158 = vpop.f32.mrf.mxu0
  %v159 = vadd.f32 %v50, %v158
  %v160 = vpop.f32.mrf.mxu0
  %161 = vmatprep.mubr.f32.mxu0 0.0
  %162 = vmatmul.mubr.f32.gmra.mxu0 %v66
  %v163 = vpop.f32.mrf.mxu0
  %v164 = vadd.f32 %v50, %v163
  %v165 = vpop.f32.mrf.mxu0
  %166 = vmatprep.mubr.f32.mxu0 0.0
  %167 = vmatmul.mubr.f32.gmra.mxu0 %v69
  %v168 = vpop.f32.mrf.mxu0
  %v169 = vadd.f32 %v50, %v168
  %v170 = vpop.f32.mrf.mxu0
  %171 = vmatprep.mubr.f32.mxu0 0.0
  %172 = vmatmul.mubr.f32.gmra.mxu0 %v72
  %v173 = vpop.f32.mrf.mxu0
  %v174 = vadd.f32 %v50, %v173
  %v175 = vpop.f32.mrf.mxu0
  %176 = vmatprep.mubr.f32.mxu0 0.0
  %177 = vmatmul.mubr.f32.gmra.mxu0 %v75
  %v178 = vpop.f32.mrf.mxu0
  %v179 = vadd.f32 %v50, %v178
  %v180 = vpop.f32.mrf.mxu0
  %181 = vdwg.mxu0
  %182 = vst [vmem:[#allocation2] sm:$0xff] %v144
  %183 = vst [vmem:[#allocation2 + $0x8] sm:$0xff] %v149
  %184 = vst [vmem:[#allocation2 + $0x10] sm:$0xff] %v154
  %185 = vst [vmem:[#allocation2 + $0x18] sm:$0xff] %v159
  %186 = vst [vmem:[#allocation2 + $0x20] sm:$0xff] %v164
  %187 = vst [vmem:[#allocation2 + $0x28] sm:$0xff] %v169
  %188 = vst [vmem:[#allocation2 + $0x30] sm:$0xff] %v174
  %189 = vst [vmem:[#allocation2 + $0x38] sm:$0xff] %v179
  %v190 = vld [vmem:[%s2] sm:$0xff]
  %v191 = vld [vmem:[%s2 + $0x8] sm:$0xff]
  %v192 = vld [vmem:[%s2 + $0x10] sm:$0xff]
  %v193 = vld [vmem:[%s2 + $0x18] sm:$0xff]
  %v194 = vld [vmem:[#allocation4] sm:$0xff]
  %s195 = scalar_lea.vmem [#allocation4], 8
  %v196 = vld [vmem:[%s195] sm:$0xff]
  %v197 = vld [vmem:[#allocation2] sm:$0xff]
  %v199 = vsel %vm52, %v194, 0
  %201 = vmatprep.subr.mxu0 0.0
  %202 = vmatpush1.msra.mxu0 0.0
  %203 = vmatprep.subr.mxu0 0.0
  %204 = vmatpush1.msra.mxu0 0.0
  %205 = vmatprep.subr.mxu0 0.0
  %206 = vmatpush1.msra.mxu0 0.0
  %207 = vmatprep.subr.mxu0 0.0
  %208 = vmatpush1.msra.mxu0 0.0
  %209 = vmatprep.subr.mxu0 0.0
  %210 = vmatpush1.msra.mxu0 0.0
  %211 = vmatprep.subr.mxu0 0.0
  %212 = vmatpush1.msra.mxu0 0.0
  %213 = vmatprep.subr.mxu0 0.0
  %214 = vmatpush1.msra.mxu0 0.0
  %215 = vmatprep.subr.mxu0 0.0
  %216 = vmatpush1.msra.mxu0 0.0
  %217 = vmatprep.subr.mxu0 0.0
  %218 = vmatpush1.msra.mxu0 0.0
  %219 = vmatprep.subr.mxu0 0.0
  %220 = vmatpush1.msra.mxu0 0.0
  %221 = vmatprep.subr.mxu0 0.0
  %222 = vmatpush1.msra.mxu0 0.0
  %223 = vmatprep.subr.mxu0 0.0
  %224 = vmatpush1.msra.mxu0 0.0
  %225 = vmatprep.subr.mxu0 0.0
  %226 = vmatpush1.msra.mxu0 %v193
  %227 = vmatprep.subr.mxu0 0.0
  %228 = vmatpush1.msra.mxu0 %v192
  %229 = vmatprep.subr.mxu0 0.0
  %230 = vmatpush1.msra.mxu0 %v191
  %231 = vmatprep.subr.mxu0 0.0
  %232 = vmatpush1.msra.mxu0 %v190
  %233 = vmatprep.subr.mxu0 0.0
  %234 = vmatpush2.msra.mxu0 0.0
  %235 = vmatprep.subr.mxu0 0.0
  %236 = vmatpush2.msra.mxu0 0.0
  %237 = vmatprep.subr.mxu0 0.0
  %238 = vmatpush2.msra.mxu0 0.0
  %239 = vmatprep.subr.mxu0 0.0
  %240 = vmatpush2.msra.mxu0 0.0
  %241 = vmatprep.subr.mxu0 0.0
  %242 = vmatpush2.msra.mxu0 0.0
  %243 = vmatprep.subr.mxu0 0.0
  %244 = vmatpush2.msra.mxu0 0.0
  %245 = vmatprep.subr.mxu0 0.0
  %246 = vmatpush2.msra.mxu0 0.0
  %247 = vmatprep.subr.mxu0 0.0
  %248 = vmatpush2.msra.mxu0 0.0
  %249 = vmatprep.subr.mxu0 0.0
  %250 = vmatpush2.msra.mxu0 0.0
  %251 = vmatprep.subr.mxu0 0.0
  %252 = vmatpush2.msra.mxu0 0.0
  %253 = vmatprep.subr.mxu0 0.0
  %254 = vmatpush2.msra.mxu0 0.0
  %255 = vmatprep.subr.mxu0 0.0
  %256 = vmatpush2.msra.mxu0 0.0
  %257 = vmatprep.subr.mxu0 0.0
  %258 = vmatpush2.msra.mxu0 0.0
  %259 = vmatprep.subr.mxu0 0.0
  %260 = vmatpush2.msra.mxu0 0.0
  %261 = vmatprep.subr.mxu0 0.0
  %262 = vmatpush2.msra.mxu0 0.0
  %263 = vmatprep.subr.mxu0 0.0
  %264 = vmatpush2.msra.mxu0 0.0
  %265 = vmatprep.mubr.f32.mxu0 0.0
  %266 = vmatmul.mubr.f32.gmra.mxu0 %v199
  %v267 = vpop.f32.mrf.mxu0
  %v268 = vadd.f32 0.0, %v267
  %v269 = vpop.f32.mrf.mxu0
  %270 = vdwg.mxu0
  %v271 = vadd.f32 %v197, %v268
  %v272 = vsub.f32 0.0, %v271
  %v273 = vmul.f32 %v272, 1.442695
  %v274 = vpow.pop %v273
  %v275 = vadd.f32 %v274, 1.0
  %v276 = vrcp.pop %v275
  %v277 = vmul.f32 1.0, %v276
  %v278 = vtanh.pop %v271
  %280 = vrot.lane.b32.xlu0 %v196, 32
  %v281 = vpop.permute.xlu0 %280
  %v283 = vmul.f32 %v277, %v281
  %285 = vrot.lane.b32.xlu0 %v278, 64
  %v286 = vpop.permute.xlu0 %285
  %v288 = vmul.f32 %v277, %v286
  %290 = vrot.lane.b32.xlu0 %v288, 32
  %v291 = vpop.permute.xlu0 %290
  %v293 = vadd.f32 %v283, %v291
  %v294 = vtanh.pop %v293
  %296 = vrot.lane.b32.xlu0 %v294, 64
  %v297 = vpop.permute.xlu0 %296
  %v299 = vmul.f32 %v277, %v297
  %301 = vrot.lane.b32.xlu0 %v299, 32
  %v302 = vpop.permute.xlu0 %301
  %304 = vst.msk [vmem:[#allocation3] sm:$0xff] %vm52, %v302
  %s305 = scalar_lea.vmem [#allocation2], 8
  %v306 = vld [vmem:[%s305] sm:$0xff]
  %v307 = vsel %vm52, %v302, 0
  %309 = vmatprep.subr.mxu0 0.0
  %310 = vmatpush1.msra.mxu0 0.0
  %311 = vmatprep.subr.mxu0 0.0
  %312 = vmatpush1.msra.mxu0 0.0
  %313 = vmatprep.subr.mxu0 0.0
  %314 = vmatpush1.msra.mxu0 0.0
  %315 = vmatprep.subr.mxu0 0.0
  %316 = vmatpush1.msra.mxu0 0.0
  %317 = vmatprep.subr.mxu0 0.0
  %318 = vmatpush1.msra.mxu0 0.0
  %319 = vmatprep.subr.mxu0 0.0
  %320 = vmatpush1.msra.mxu0 0.0
  %321 = vmatprep.subr.mxu0 0.0
  %322 = vmatpush1.msra.mxu0 0.0
  %323 = vmatprep.subr.mxu0 0.0
  %324 = vmatpush1.msra.mxu0 0.0
  %325 = vmatprep.subr.mxu0 0.0
  %326 = vmatpush1.msra.mxu0 0.0
  %327 = vmatprep.subr.mxu0 0.0
  %328 = vmatpush1.msra.mxu0 0.0
  %329 = vmatprep.subr.mxu0 0.0
  %330 = vmatpush1.msra.mxu0 0.0
  %331 = vmatprep.subr.mxu0 0.0
  %332 = vmatpush1.msra.mxu0 0.0
  %333 = vmatprep.subr.mxu0 0.0
  %334 = vmatpush1.msra.mxu0 %v193
  %335 = vmatprep.subr.mxu0 0.0
  %336 = vmatpush1.msra.mxu0 %v192
  %337 = vmatprep.subr.mxu0 0.0
  %338 = vmatpush1.msra.mxu0 %v191
  %339 = vmatprep.subr.mxu0 0.0
  %340 = vmatpush1.msra.mxu0 %v190
  %341 = vmatprep.subr.mxu0 0.0
  %342 = vmatpush2.msra.mxu0 0.0
  %343 = vmatprep.subr.mxu0 0.0
  %344 = vmatpush2.msra.mxu0 0.0
  %345 = vmatprep.subr.mxu0 0.0
  %346 = vmatpush2.msra.mxu0 0.0
  %347 = vmatprep.subr.mxu0 0.0
  %348 = vmatpush2.msra.mxu0 0.0
  %349 = vmatprep.subr.mxu0 0.0
  %350 = vmatpush2.msra.mxu0 0.0
  %351 = vmatprep.subr.mxu0 0.0
  %352 = vmatpush2.msra.mxu0 0.0
  %353 = vmatprep.subr.mxu0 0.0
  %354 = vmatpush2.msra.mxu0 0.0
  %355 = vmatprep.subr.mxu0 0.0
  %356 = vmatpush2.msra.mxu0 0.0
  %357 = vmatprep.subr.mxu0 0.0
  %358 = vmatpush2.msra.mxu0 0.0
  %359 = vmatprep.subr.mxu0 0.0
  %360 = vmatpush2.msra.mxu0 0.0
  %361 = vmatprep.subr.mxu0 0.0
  %362 = vmatpush2.msra.mxu0 0.0
  %363 = vmatprep.subr.mxu0 0.0
  %364 = vmatpush2.msra.mxu0 0.0
  %365 = vmatprep.subr.mxu0 0.0
  %366 = vmatpush2.msra.mxu0 0.0
  %367 = vmatprep.subr.mxu0 0.0
  %368 = vmatpush2.msra.mxu0 0.0
  %369 = vmatprep.subr.mxu0 0.0
  %370 = vmatpush2.msra.mxu0 0.0
  %371 = vmatprep.subr.mxu0 0.0
  %372 = vmatpush2.msra.mxu0 0.0
  %373 = vmatprep.mubr.f32.mxu0 0.0
  %374 = vmatmul.mubr.f32.gmra.mxu0 %v307
  %v375 = vpop.f32.mrf.mxu0
  %v376 = vadd.f32 0.0, %v375
  %v377 = vpop.f32.mrf.mxu0
  %378 = vdwg.mxu0
  %v379 = vadd.f32 %v306, %v376
  %v380 = vsub.f32 0.0, %v379
  %v381 = vmul.f32 %v380, 1.442695
  %v382 = vpow.pop %v381
  %v383 = vadd.f32 %v382, 1.0
  %v384 = vrcp.pop %v383
  %v385 = vmul.f32 1.0, %v384
  %v386 = vtanh.pop %v379
  %v387 = vmul.f32 %v385, %v293
  %389 = vrot.lane.b32.xlu0 %v386, 64
  %v390 = vpop.permute.xlu0 %389
  %v392 = vmul.f32 %v385, %v390
  %394 = vrot.lane.b32.xlu0 %v392, 32
  %v395 = vpop.permute.xlu0 %394
  %v397 = vadd.f32 %v387, %v395
  %v398 = vtanh.pop %v397
  %400 = vrot.lane.b32.xlu0 %v398, 64
  %v401 = vpop.permute.xlu0 %400
  %v403 = vmul.f32 %v385, %v401
  %405 = vrot.lane.b32.xlu0 %v403, 32
  %v406 = vpop.permute.xlu0 %405
  %s408 = scalar_lea.vmem [#allocation3], 8
  %409 = vst.msk [vmem:[%s408] sm:$0xff] %vm52, %v406
  %s410 = scalar_lea.vmem [#allocation2], 16
  %v411 = vld [vmem:[%s410] sm:$0xff]
  %v412 = vsel %vm52, %v406, 0
  %414 = vmatprep.subr.mxu0 0.0
  %415 = vmatpush1.msra.mxu0 0.0
  %416 = vmatprep.subr.mxu0 0.0
  %417 = vmatpush1.msra.mxu0 0.0
  %418 = vmatprep.subr.mxu0 0.0
  %419 = vmatpush1.msra.mxu0 0.0
  %420 = vmatprep.subr.mxu0 0.0
  %421 = vmatpush1.msra.mxu0 0.0
  %422 = vmatprep.subr.mxu0 0.0
  %423 = vmatpush1.msra.mxu0 0.0
  %424 = vmatprep.subr.mxu0 0.0
  %425 = vmatpush1.msra.mxu0 0.0
  %426 = vmatprep.subr.mxu0 0.0
  %427 = vmatpush1.msra.mxu0 0.0
  %428 = vmatprep.subr.mxu0 0.0
  %429 = vmatpush1.msra.mxu0 0.0
  %430 = vmatprep.subr.mxu0 0.0
  %431 = vmatpush1.msra.mxu0 0.0
  %432 = vmatprep.subr.mxu0 0.0
  %433 = vmatpush1.msra.mxu0 0.0
  %434 = vmatprep.subr.mxu0 0.0
  %435 = vmatpush1.msra.mxu0 0.0
  %436 = vmatprep.subr.mxu0 0.0
  %437 = vmatpush1.msra.mxu0 0.0
  %438 = vmatprep.subr.mxu0 0.0
  %439 = vmatpush1.msra.mxu0 %v193
  %440 = vmatprep.subr.mxu0 0.0
  %441 = vmatpush1.msra.mxu0 %v192
  %442 = vmatprep.subr.mxu0 0.0
  %443 = vmatpush1.msra.mxu0 %v191
  %444 = vmatprep.subr.mxu0 0.0
  %445 = vmatpush1.msra.mxu0 %v190
  %446 = vmatprep.subr.mxu0 0.0
  %447 = vmatpush2.msra.mxu0 0.0
  %448 = vmatprep.subr.mxu0 0.0
  %449 = vmatpush2.msra.mxu0 0.0
  %450 = vmatprep.subr.mxu0 0.0
  %451 = vmatpush2.msra.mxu0 0.0
  %452 = vmatprep.subr.mxu0 0.0
  %453 = vmatpush2.msra.mxu0 0.0
  %454 = vmatprep.subr.mxu0 0.0
  %455 = vmatpush2.msra.mxu0 0.0
  %456 = vmatprep.subr.mxu0 0.0
  %457 = vmatpush2.msra.mxu0 0.0
  %458 = vmatprep.subr.mxu0 0.0
  %459 = vmatpush2.msra.mxu0 0.0
  %460 = vmatprep.subr.mxu0 0.0
  %461 = vmatpush2.msra.mxu0 0.0
  %462 = vmatprep.subr.mxu0 0.0
  %463 = vmatpush2.msra.mxu0 0.0
  %464 = vmatprep.subr.mxu0 0.0
  %465 = vmatpush2.msra.mxu0 0.0
  %466 = vmatprep.subr.mxu0 0.0
  %467 = vmatpush2.msra.mxu0 0.0
  %468 = vmatprep.subr.mxu0 0.0
  %469 = vmatpush2.msra.mxu0 0.0
  %470 = vmatprep.subr.mxu0 0.0
  %471 = vmatpush2.msra.mxu0 0.0
  %472 = vmatprep.subr.mxu0 0.0
  %473 = vmatpush2.msra.mxu0 0.0
  %474 = vmatprep.subr.mxu0 0.0
  %475 = vmatpush2.msra.mxu0 0.0
  %476 = vmatprep.subr.mxu0 0.0
  %477 = vmatpush2.msra.mxu0 0.0
  %478 = vmatprep.mubr.f32.mxu0 0.0
  %479 = vmatmul.mubr.f32.gmra.mxu0 %v412
  %v480 = vpop.f32.mrf.mxu0
  %v481 = vadd.f32 0.0, %v480
  %v482 = vpop.f32.mrf.mxu0
  %483 = vdwg.mxu0
  %v484 = vadd.f32 %v411, %v481
  %v485 = vsub.f32 0.0, %v484
  %v486 = vmul.f32 %v485, 1.442695
  %v487 = vpow.pop %v486
  %v488 = vadd.f32 %v487, 1.0
  %v489 = vrcp.pop %v488
  %v490 = vmul.f32 1.0, %v489
  %v491 = vtanh.pop %v484
  %v492 = vmul.f32 %v490, %v397
  %494 = vrot.lane.b32.xlu0 %v491, 64
  %v495 = vpop.permute.xlu0 %494
  %v497 = vmul.f32 %v490, %v495
  %499 = vrot.lane.b32.xlu0 %v497, 32
  %v500 = vpop.permute.xlu0 %499
  %v502 = vadd.f32 %v492, %v500
  %v503 = vtanh.pop %v502
  %505 = vrot.lane.b32.xlu0 %v503, 64
  %v506 = vpop.permute.xlu0 %505
  %v508 = vmul.f32 %v490, %v506
  %510 = vrot.lane.b32.xlu0 %v508, 32
  %v511 = vpop.permute.xlu0 %510
  %s513 = scalar_lea.vmem [#allocation3], 16
  %514 = vst.msk [vmem:[%s513] sm:$0xff] %vm52, %v511
  %s515 = scalar_lea.vmem [#allocation2], 24
  %v516 = vld [vmem:[%s515] sm:$0xff]
  %v517 = vsel %vm52, %v511, 0
  %519 = vmatprep.subr.mxu0 0.0
  %520 = vmatpush1.msra.mxu0 0.0
  %521 = vmatprep.subr.mxu0 0.0
  %522 = vmatpush1.msra.mxu0 0.0
  %523 = vmatprep.subr.mxu0 0.0
  %524 = vmatpush1.msra.mxu0 0.0
  %525 = vmatprep.subr.mxu0 0.0
  %526 = vmatpush1.msra.mxu0 0.0
  %527 = vmatprep.subr.mxu0 0.0
  %528 = vmatpush1.msra.mxu0 0.0
  %529 = vmatprep.subr.mxu0 0.0
  %530 = vmatpush1.msra.mxu0 0.0
  %531 = vmatprep.subr.mxu0 0.0
  %532 = vmatpush1.msra.mxu0 0.0
  %533 = vmatprep.subr.mxu0 0.0
  %534 = vmatpush1.msra.mxu0 0.0
  %535 = vmatprep.subr.mxu0 0.0
  %536 = vmatpush1.msra.mxu0 0.0
  %537 = vmatprep.subr.mxu0 0.0
  %538 = vmatpush1.msra.mxu0 0.0
  %539 = vmatprep.subr.mxu0 0.0
  %540 = vmatpush1.msra.mxu0 0.0
  %541 = vmatprep.subr.mxu0 0.0
  %542 = vmatpush1.msra.mxu0 0.0
  %543 = vmatprep.subr.mxu0 0.0
  %544 = vmatpush1.msra.mxu0 %v193
  %545 = vmatprep.subr.mxu0 0.0
  %546 = vmatpush1.msra.mxu0 %v192
  %547 = vmatprep.subr.mxu0 0.0
  %548 = vmatpush1.msra.mxu0 %v191
  %549 = vmatprep.subr.mxu0 0.0
  %550 = vmatpush1.msra.mxu0 %v190
  %551 = vmatprep.subr.mxu0 0.0
  %552 = vmatpush2.msra.mxu0 0.0
  %553 = vmatprep.subr.mxu0 0.0
  %554 = vmatpush2.msra.mxu0 0.0
  %555 = vmatprep.subr.mxu0 0.0
  %556 = vmatpush2.msra.mxu0 0.0
  %557 = vmatprep.subr.mxu0 0.0
  %558 = vmatpush2.msra.mxu0 0.0
  %559 = vmatprep.subr.mxu0 0.0
  %560 = vmatpush2.msra.mxu0 0.0
  %561 = vmatprep.subr.mxu0 0.0
  %562 = vmatpush2.msra.mxu0 0.0
  %563 = vmatprep.subr.mxu0 0.0
  %564 = vmatpush2.msra.mxu0 0.0
  %565 = vmatprep.subr.mxu0 0.0
  %566 = vmatpush2.msra.mxu0 0.0
  %567 = vmatprep.subr.mxu0 0.0
  %568 = vmatpush2.msra.mxu0 0.0
  %569 = vmatprep.subr.mxu0 0.0
  %570 = vmatpush2.msra.mxu0 0.0
  %571 = vmatprep.subr.mxu0 0.0
  %572 = vmatpush2.msra.mxu0 0.0
  %573 = vmatprep.subr.mxu0 0.0
  %574 = vmatpush2.msra.mxu0 0.0
  %575 = vmatprep.subr.mxu0 0.0
  %576 = vmatpush2.msra.mxu0 0.0
  %577 = vmatprep.subr.mxu0 0.0
  %578 = vmatpush2.msra.mxu0 0.0
  %579 = vmatprep.subr.mxu0 0.0
  %580 = vmatpush2.msra.mxu0 0.0
  %581 = vmatprep.subr.mxu0 0.0
  %582 = vmatpush2.msra.mxu0 0.0
  %583 = vmatprep.mubr.f32.mxu0 0.0
  %584 = vmatmul.mubr.f32.gmra.mxu0 %v517
  %v585 = vpop.f32.mrf.mxu0
  %v586 = vadd.f32 0.0, %v585
  %v587 = vpop.f32.mrf.mxu0
  %588 = vdwg.mxu0
  %v589 = vadd.f32 %v516, %v586
  %v590 = vsub.f32 0.0, %v589
  %v591 = vmul.f32 %v590, 1.442695
  %v592 = vpow.pop %v591
  %v593 = vadd.f32 %v592, 1.0
  %v594 = vrcp.pop %v593
  %v595 = vmul.f32 1.0, %v594
  %v596 = vtanh.pop %v589
  %v597 = vmul.f32 %v595, %v502
  %599 = vrot.lane.b32.xlu0 %v596, 64
  %v600 = vpop.permute.xlu0 %599
  %v602 = vmul.f32 %v595, %v600
  %604 = vrot.lane.b32.xlu0 %v602, 32
  %v605 = vpop.permute.xlu0 %604
  %v607 = vadd.f32 %v597, %v605
  %v608 = vtanh.pop %v607
  %610 = vrot.lane.b32.xlu0 %v608, 64
  %v611 = vpop.permute.xlu0 %610
  %v613 = vmul.f32 %v595, %v611
  %615 = vrot.lane.b32.xlu0 %v613, 32
  %v616 = vpop.permute.xlu0 %615
  %s618 = scalar_lea.vmem [#allocation3], 24
  %619 = vst.msk [vmem:[%s618] sm:$0xff] %vm52, %v616
  %s620 = scalar_lea.vmem [#allocation2], 32
  %v621 = vld [vmem:[%s620] sm:$0xff]
  %v622 = vsel %vm52, %v616, 0
  %624 = vmatprep.subr.mxu0 0.0
  %625 = vmatpush1.msra.mxu0 0.0
  %626 = vmatprep.subr.mxu0 0.0
  %627 = vmatpush1.msra.mxu0 0.0
  %628 = vmatprep.subr.mxu0 0.0
  %629 = vmatpush1.msra.mxu0 0.0
  %630 = vmatprep.subr.mxu0 0.0
  %631 = vmatpush1.msra.mxu0 0.0
  %632 = vmatprep.subr.mxu0 0.0
  %633 = vmatpush1.msra.mxu0 0.0
  %634 = vmatprep.subr.mxu0 0.0
  %635 = vmatpush1.msra.mxu0 0.0
  %636 = vmatprep.subr.mxu0 0.0
  %637 = vmatpush1.msra.mxu0 0.0
  %638 = vmatprep.subr.mxu0 0.0
  %639 = vmatpush1.msra.mxu0 0.0
  %640 = vmatprep.subr.mxu0 0.0
  %641 = vmatpush1.msra.mxu0 0.0
  %642 = vmatprep.subr.mxu0 0.0
  %643 = vmatpush1.msra.mxu0 0.0
  %644 = vmatprep.subr.mxu0 0.0
  %645 = vmatpush1.msra.mxu0 0.0
  %646 = vmatprep.subr.mxu0 0.0
  %647 = vmatpush1.msra.mxu0 0.0
  %648 = vmatprep.subr.mxu0 0.0
  %649 = vmatpush1.msra.mxu0 %v193
  %650 = vmatprep.subr.mxu0 0.0
  %651 = vmatpush1.msra.mxu0 %v192
  %652 = vmatprep.subr.mxu0 0.0
  %653 = vmatpush1.msra.mxu0 %v191
  %654 = vmatprep.subr.mxu0 0.0
  %655 = vmatpush1.msra.mxu0 %v190
  %656 = vmatprep.subr.mxu0 0.0
  %657 = vmatpush2.msra.mxu0 0.0
  %658 = vmatprep.subr.mxu0 0.0
  %659 = vmatpush2.msra.mxu0 0.0
  %660 = vmatprep.subr.mxu0 0.0
  %661 = vmatpush2.msra.mxu0 0.0
  %662 = vmatprep.subr.mxu0 0.0
  %663 = vmatpush2.msra.mxu0 0.0
  %664 = vmatprep.subr.mxu0 0.0
  %665 = vmatpush2.msra.mxu0 0.0
  %666 = vmatprep.subr.mxu0 0.0
  %667 = vmatpush2.msra.mxu0 0.0
  %668 = vmatprep.subr.mxu0 0.0
  %669 = vmatpush2.msra.mxu0 0.0
  %670 = vmatprep.subr.mxu0 0.0
  %671 = vmatpush2.msra.mxu0 0.0
  %672 = vmatprep.subr.mxu0 0.0
  %673 = vmatpush2.msra.mxu0 0.0
  %674 = vmatprep.subr.mxu0 0.0
  %675 = vmatpush2.msra.mxu0 0.0
  %676 = vmatprep.subr.mxu0 0.0
  %677 = vmatpush2.msra.mxu0 0.0
  %678 = vmatprep.subr.mxu0 0.0
  %679 = vmatpush2.msra.mxu0 0.0
  %680 = vmatprep.subr.mxu0 0.0
  %681 = vmatpush2.msra.mxu0 0.0
  %682 = vmatprep.subr.mxu0 0.0
  %683 = vmatpush2.msra.mxu0 0.0
  %684 = vmatprep.subr.mxu0 0.0
  %685 = vmatpush2.msra.mxu0 0.0
  %686 = vmatprep.subr.mxu0 0.0
  %687 = vmatpush2.msra.mxu0 0.0
  %688 = vmatprep.mubr.f32.mxu0 0.0
  %689 = vmatmul.mubr.f32.gmra.mxu0 %v622
  %v690 = vpop.f32.mrf.mxu0
  %v691 = vadd.f32 0.0, %v690
  %v692 = vpop.f32.mrf.mxu0
  %693 = vdwg.mxu0
  %v694 = vadd.f32 %v621, %v691
  %v695 = vsub.f32 0.0, %v694
  %v696 = vmul.f32 %v695, 1.442695
  %v697 = vpow.pop %v696
  %v698 = vadd.f32 %v697, 1.0
  %v699 = vrcp.pop %v698
  %v700 = vmul.f32 1.0, %v699
  %v701 = vtanh.pop %v694
  %v702 = vmul.f32 %v700, %v607
  %704 = vrot.lane.b32.xlu0 %v701, 64
  %v705 = vpop.permute.xlu0 %704
  %v707 = vmul.f32 %v700, %v705
  %709 = vrot.lane.b32.xlu0 %v707, 32
  %v710 = vpop.permute.xlu0 %709
  %v712 = vadd.f32 %v702, %v710
  %v713 = vtanh.pop %v712
  %715 = vrot.lane.b32.xlu0 %v713, 64
  %v716 = vpop.permute.xlu0 %715
  %v718 = vmul.f32 %v700, %v716
  %720 = vrot.lane.b32.xlu0 %v718, 32
  %v721 = vpop.permute.xlu0 %720
  %s723 = scalar_lea.vmem [#allocation3], 32
  %724 = vst.msk [vmem:[%s723] sm:$0xff] %vm52, %v721
  %s725 = scalar_lea.vmem [#allocation2], 40
  %v726 = vld [vmem:[%s725] sm:$0xff]
  %v727 = vsel %vm52, %v721, 0
  %729 = vmatprep.subr.mxu0 0.0
  %730 = vmatpush1.msra.mxu0 0.0
  %731 = vmatprep.subr.mxu0 0.0
  %732 = vmatpush1.msra.mxu0 0.0
  %733 = vmatprep.subr.mxu0 0.0
  %734 = vmatpush1.msra.mxu0 0.0
  %735 = vmatprep.subr.mxu0 0.0
  %736 = vmatpush1.msra.mxu0 0.0
  %737 = vmatprep.subr.mxu0 0.0
  %738 = vmatpush1.msra.mxu0 0.0
  %739 = vmatprep.subr.mxu0 0.0
  %740 = vmatpush1.msra.mxu0 0.0
  %741 = vmatprep.subr.mxu0 0.0
  %742 = vmatpush1.msra.mxu0 0.0
  %743 = vmatprep.subr.mxu0 0.0
  %744 = vmatpush1.msra.mxu0 0.0
  %745 = vmatprep.subr.mxu0 0.0
  %746 = vmatpush1.msra.mxu0 0.0
  %747 = vmatprep.subr.mxu0 0.0
  %748 = vmatpush1.msra.mxu0 0.0
  %749 = vmatprep.subr.mxu0 0.0
  %750 = vmatpush1.msra.mxu0 0.0
  %751 = vmatprep.subr.mxu0 0.0
  %752 = vmatpush1.msra.mxu0 0.0
  %753 = vmatprep.subr.mxu0 0.0
  %754 = vmatpush1.msra.mxu0 %v193
  %755 = vmatprep.subr.mxu0 0.0
  %756 = vmatpush1.msra.mxu0 %v192
  %757 = vmatprep.subr.mxu0 0.0
  %758 = vmatpush1.msra.mxu0 %v191
  %759 = vmatprep.subr.mxu0 0.0
  %760 = vmatpush1.msra.mxu0 %v190
  %761 = vmatprep.subr.mxu0 0.0
  %762 = vmatpush2.msra.mxu0 0.0
  %763 = vmatprep.subr.mxu0 0.0
  %764 = vmatpush2.msra.mxu0 0.0
  %765 = vmatprep.subr.mxu0 0.0
  %766 = vmatpush2.msra.mxu0 0.0
  %767 = vmatprep.subr.mxu0 0.0
  %768 = vmatpush2.msra.mxu0 0.0
  %769 = vmatprep.subr.mxu0 0.0
  %770 = vmatpush2.msra.mxu0 0.0
  %771 = vmatprep.subr.mxu0 0.0
  %772 = vmatpush2.msra.mxu0 0.0
  %773 = vmatprep.subr.mxu0 0.0
  %774 = vmatpush2.msra.mxu0 0.0
  %775 = vmatprep.subr.mxu0 0.0
  %776 = vmatpush2.msra.mxu0 0.0
  %777 = vmatprep.subr.mxu0 0.0
  %778 = vmatpush2.msra.mxu0 0.0
  %779 = vmatprep.subr.mxu0 0.0
  %780 = vmatpush2.msra.mxu0 0.0
  %781 = vmatprep.subr.mxu0 0.0
  %782 = vmatpush2.msra.mxu0 0.0
  %783 = vmatprep.subr.mxu0 0.0
  %784 = vmatpush2.msra.mxu0 0.0
  %785 = vmatprep.subr.mxu0 0.0
  %786 = vmatpush2.msra.mxu0 0.0
  %787 = vmatprep.subr.mxu0 0.0
  %788 = vmatpush2.msra.mxu0 0.0
  %789 = vmatprep.subr.mxu0 0.0
  %790 = vmatpush2.msra.mxu0 0.0
  %791 = vmatprep.subr.mxu0 0.0
  %792 = vmatpush2.msra.mxu0 0.0
  %793 = vmatprep.mubr.f32.mxu0 0.0
  %794 = vmatmul.mubr.f32.gmra.mxu0 %v727
  %v795 = vpop.f32.mrf.mxu0
  %v796 = vadd.f32 0.0, %v795
  %v797 = vpop.f32.mrf.mxu0
  %798 = vdwg.mxu0
  %v799 = vadd.f32 %v726, %v796
  %v800 = vsub.f32 0.0, %v799
  %v801 = vmul.f32 %v800, 1.442695
  %v802 = vpow.pop %v801
  %v803 = vadd.f32 %v802, 1.0
  %v804 = vrcp.pop %v803
  %v805 = vmul.f32 1.0, %v804
  %v806 = vtanh.pop %v799
  %v807 = vmul.f32 %v805, %v712
  %809 = vrot.lane.b32.xlu0 %v806, 64
  %v810 = vpop.permute.xlu0 %809
  %v812 = vmul.f32 %v805, %v810
  %814 = vrot.lane.b32.xlu0 %v812, 32
  %v815 = vpop.permute.xlu0 %814
  %v817 = vadd.f32 %v807, %v815
  %v818 = vtanh.pop %v817
  %820 = vrot.lane.b32.xlu0 %v818, 64
  %v821 = vpop.permute.xlu0 %820
  %v823 = vmul.f32 %v805, %v821
  %825 = vrot.lane.b32.xlu0 %v823, 32
  %v826 = vpop.permute.xlu0 %825
  %s828 = scalar_lea.vmem [#allocation3], 40
  %829 = vst.msk [vmem:[%s828] sm:$0xff] %vm52, %v826
  %s830 = scalar_lea.vmem [#allocation2], 48
  %v831 = vld [vmem:[%s830] sm:$0xff]
  %v832 = vsel %vm52, %v826, 0
  %834 = vmatprep.subr.mxu0 0.0
  %835 = vmatpush1.msra.mxu0 0.0
  %836 = vmatprep.subr.mxu0 0.0
  %837 = vmatpush1.msra.mxu0 0.0
  %838 = vmatprep.subr.mxu0 0.0
  %839 = vmatpush1.msra.mxu0 0.0
  %840 = vmatprep.subr.mxu0 0.0
  %841 = vmatpush1.msra.mxu0 0.0
  %842 = vmatprep.subr.mxu0 0.0
  %843 = vmatpush1.msra.mxu0 0.0
  %844 = vmatprep.subr.mxu0 0.0
  %845 = vmatpush1.msra.mxu0 0.0
  %846 = vmatprep.subr.mxu0 0.0
  %847 = vmatpush1.msra.mxu0 0.0
  %848 = vmatprep.subr.mxu0 0.0
  %849 = vmatpush1.msra.mxu0 0.0
  %850 = vmatprep.subr.mxu0 0.0
  %851 = vmatpush1.msra.mxu0 0.0
  %852 = vmatprep.subr.mxu0 0.0
  %853 = vmatpush1.msra.mxu0 0.0
  %854 = vmatprep.subr.mxu0 0.0
  %855 = vmatpush1.msra.mxu0 0.0
  %856 = vmatprep.subr.mxu0 0.0
  %857 = vmatpush1.msra.mxu0 0.0
  %858 = vmatprep.subr.mxu0 0.0
  %859 = vmatpush1.msra.mxu0 %v193
  %860 = vmatprep.subr.mxu0 0.0
  %861 = vmatpush1.msra.mxu0 %v192
  %862 = vmatprep.subr.mxu0 0.0
  %863 = vmatpush1.msra.mxu0 %v191
  %864 = vmatprep.subr.mxu0 0.0
  %865 = vmatpush1.msra.mxu0 %v190
  %866 = vmatprep.subr.mxu0 0.0
  %867 = vmatpush2.msra.mxu0 0.0
  %868 = vmatprep.subr.mxu0 0.0
  %869 = vmatpush2.msra.mxu0 0.0
  %870 = vmatprep.subr.mxu0 0.0
  %871 = vmatpush2.msra.mxu0 0.0
  %872 = vmatprep.subr.mxu0 0.0
  %873 = vmatpush2.msra.mxu0 0.0
  %874 = vmatprep.subr.mxu0 0.0
  %875 = vmatpush2.msra.mxu0 0.0
  %876 = vmatprep.subr.mxu0 0.0
  %877 = vmatpush2.msra.mxu0 0.0
  %878 = vmatprep.subr.mxu0 0.0
  %879 = vmatpush2.msra.mxu0 0.0
  %880 = vmatprep.subr.mxu0 0.0
  %881 = vmatpush2.msra.mxu0 0.0
  %882 = vmatprep.subr.mxu0 0.0
  %883 = vmatpush2.msra.mxu0 0.0
  %884 = vmatprep.subr.mxu0 0.0
  %885 = vmatpush2.msra.mxu0 0.0
  %886 = vmatprep.subr.mxu0 0.0
  %887 = vmatpush2.msra.mxu0 0.0
  %888 = vmatprep.subr.mxu0 0.0
  %889 = vmatpush2.msra.mxu0 0.0
  %890 = vmatprep.subr.mxu0 0.0
  %891 = vmatpush2.msra.mxu0 0.0
  %892 = vmatprep.subr.mxu0 0.0
  %893 = vmatpush2.msra.mxu0 0.0
  %894 = vmatprep.subr.mxu0 0.0
  %895 = vmatpush2.msra.mxu0 0.0
  %896 = vmatprep.subr.mxu0 0.0
  %897 = vmatpush2.msra.mxu0 0.0
  %898 = vmatprep.mubr.f32.mxu0 0.0
  %899 = vmatmul.mubr.f32.gmra.mxu0 %v832
  %v900 = vpop.f32.mrf.mxu0
  %v901 = vadd.f32 0.0, %v900
  %v902 = vpop.f32.mrf.mxu0
  %903 = vdwg.mxu0
  %v904 = vadd.f32 %v831, %v901
  %v905 = vsub.f32 0.0, %v904
  %v906 = vmul.f32 %v905, 1.442695
  %v907 = vpow.pop %v906
  %v908 = vadd.f32 %v907, 1.0
  %v909 = vrcp.pop %v908
  %v910 = vmul.f32 1.0, %v909
  %v911 = vtanh.pop %v904
  %v912 = vmul.f32 %v910, %v817
  %914 = vrot.lane.b32.xlu0 %v911, 64
  %v915 = vpop.permute.xlu0 %914
  %v917 = vmul.f32 %v910, %v915
  %919 = vrot.lane.b32.xlu0 %v917, 32
  %v920 = vpop.permute.xlu0 %919
  %v922 = vadd.f32 %v912, %v920
  %v923 = vtanh.pop %v922
  %925 = vrot.lane.b32.xlu0 %v923, 64
  %v926 = vpop.permute.xlu0 %925
  %v928 = vmul.f32 %v910, %v926
  %930 = vrot.lane.b32.xlu0 %v928, 32
  %v931 = vpop.permute.xlu0 %930
  %s933 = scalar_lea.vmem [#allocation3], 48
  %934 = vst.msk [vmem:[%s933] sm:$0xff] %vm52, %v931
  %s935 = scalar_lea.vmem [#allocation2], 56
  %v936 = vld [vmem:[%s935] sm:$0xff]
  %v937 = vsel %vm52, %v931, 0
  %939 = vmatprep.subr.mxu0 0.0
  %940 = vmatpush1.msra.mxu0 0.0
  %941 = vmatprep.subr.mxu0 0.0
  %942 = vmatpush1.msra.mxu0 0.0
  %943 = vmatprep.subr.mxu0 0.0
  %944 = vmatpush1.msra.mxu0 0.0
  %945 = vmatprep.subr.mxu0 0.0
  %946 = vmatpush1.msra.mxu0 0.0
  %947 = vmatprep.subr.mxu0 0.0
  %948 = vmatpush1.msra.mxu0 0.0
  %949 = vmatprep.subr.mxu0 0.0
  %950 = vmatpush1.msra.mxu0 0.0
  %951 = vmatprep.subr.mxu0 0.0
  %952 = vmatpush1.msra.mxu0 0.0
  %953 = vmatprep.subr.mxu0 0.0
  %954 = vmatpush1.msra.mxu0 0.0
  %955 = vmatprep.subr.mxu0 0.0
  %956 = vmatpush1.msra.mxu0 0.0
  %957 = vmatprep.subr.mxu0 0.0
  %958 = vmatpush1.msra.mxu0 0.0
  %959 = vmatprep.subr.mxu0 0.0
  %960 = vmatpush1.msra.mxu0 0.0
  %961 = vmatprep.subr.mxu0 0.0
  %962 = vmatpush1.msra.mxu0 0.0
  %963 = vmatprep.subr.mxu0 0.0
  %964 = vmatpush1.msra.mxu0 %v193
  %965 = vmatprep.subr.mxu0 0.0
  %966 = vmatpush1.msra.mxu0 %v192
  %967 = vmatprep.subr.mxu0 0.0
  %968 = vmatpush1.msra.mxu0 %v191
  %969 = vmatprep.subr.mxu0 0.0
  %970 = vmatpush1.msra.mxu0 %v190
  %971 = vmatprep.subr.mxu0 0.0
  %972 = vmatpush2.msra.mxu0 0.0
  %973 = vmatprep.subr.mxu0 0.0
  %974 = vmatpush2.msra.mxu0 0.0
  %975 = vmatprep.subr.mxu0 0.0
  %976 = vmatpush2.msra.mxu0 0.0
  %977 = vmatprep.subr.mxu0 0.0
  %978 = vmatpush2.msra.mxu0 0.0
  %979 = vmatprep.subr.mxu0 0.0
  %980 = vmatpush2.msra.mxu0 0.0
  %981 = vmatprep.subr.mxu0 0.0
  %982 = vmatpush2.msra.mxu0 0.0
  %983 = vmatprep.subr.mxu0 0.0
  %984 = vmatpush2.msra.mxu0 0.0
  %985 = vmatprep.subr.mxu0 0.0
  %986 = vmatpush2.msra.mxu0 0.0
  %987 = vmatprep.subr.mxu0 0.0
  %988 = vmatpush2.msra.mxu0 0.0
  %989 = vmatprep.subr.mxu0 0.0
  %990 = vmatpush2.msra.mxu0 0.0
  %991 = vmatprep.subr.mxu0 0.0
  %992 = vmatpush2.msra.mxu0 0.0
  %993 = vmatprep.subr.mxu0 0.0
  %994 = vmatpush2.msra.mxu0 0.0
  %995 = vmatprep.subr.mxu0 0.0
  %996 = vmatpush2.msra.mxu0 0.0
  %997 = vmatprep.subr.mxu0 0.0
  %998 = vmatpush2.msra.mxu0 0.0
  %999 = vmatprep.subr.mxu0 0.0
  %1000 = vmatpush2.msra.mxu0 0.0
  %1001 = vmatprep.subr.mxu0 0.0
  %1002 = vmatpush2.msra.mxu0 0.0
  %1003 = vmatprep.mubr.f32.mxu0 0.0
  %1004 = vmatmul.mubr.f32.gmra.mxu0 %v937
  %v1005 = vpop.f32.mrf.mxu0
  %v1006 = vadd.f32 0.0, %v1005
  %v1007 = vpop.f32.mrf.mxu0
  %1008 = vdwg.mxu0
  %v1009 = vadd.f32 %v936, %v1006
  %v1010 = vsub.f32 0.0, %v1009
  %v1011 = vmul.f32 %v1010, 1.442695
  %v1012 = vpow.pop %v1011
  %v1013 = vadd.f32 %v1012, 1.0
  %v1014 = vrcp.pop %v1013
  %v1015 = vmul.f32 1.0, %v1014
  %v1016 = vtanh.pop %v1009
  %v1017 = vmul.f32 %v1015, %v922
  %1019 = vrot.lane.b32.xlu0 %v1016, 64
  %v1020 = vpop.permute.xlu0 %1019
  %v1022 = vmul.f32 %v1015, %v1020
  %1024 = vrot.lane.b32.xlu0 %v1022, 32
  %v1025 = vpop.permute.xlu0 %1024
  %v1027 = vadd.f32 %v1017, %v1025
  %v1028 = vtanh.pop %v1027
  %1030 = vrot.lane.b32.xlu0 %v1028, 64
  %v1031 = vpop.permute.xlu0 %1030
  %v1033 = vmul.f32 %v1015, %v1031
  %1035 = vrot.lane.b32.xlu0 %v1033, 32
  %v1036 = vpop.permute.xlu0 %1035
  %s1038 = scalar_lea.vmem [#allocation3], 56
  %1039 = vst.msk [vmem:[%s1038] sm:$0xff] %vm52, %v1036
  %1040 = vst.msk [vmem:[#allocation4] sm:$0xff] %vm52, %v1036
  %1042 = vrot.lane.b32.xlu0 %v1027, 96
  %v1043 = vpop.permute.xlu0 %1042
  %1045 = vst.msk [vmem:[%s195] sm:$0xff] %vm52, %v1043
  %v1046 = vld [vmem:[#allocation3] sm:$0xff]
  %v1047 = vld [vmem:[#allocation3 + $0x8] sm:$0xff]
  %v1048 = vld [vmem:[#allocation3 + $0x10] sm:$0xff]
  %v1049 = vld [vmem:[#allocation3 + $0x18] sm:$0xff]
  %v1050 = vld [vmem:[#allocation3 + $0x20] sm:$0xff]
  %v1051 = vld [vmem:[#allocation3 + $0x28] sm:$0xff]
  %v1052 = vld [vmem:[#allocation3 + $0x30] sm:$0xff]
  %v1053 = vld [vmem:[#allocation3 + $0x38] sm:$0xff]
  %v1054 = vld [vmem:[%s4] sm:$0xff]
  %v1055 = vld [vmem:[%s4 + $0x8] sm:$0xff]
  %v1056 = vld [vmem:[%s4 + $0x10] sm:$0xff]
  %v1057 = vld [vmem:[%s4 + $0x18] sm:$0xff]
  %v1058 = vld [vmem:[%s5] sm:$0x1]
  %v1060 = vlaneseq
  %v1061 = vshrl.u32 %v1060, 7
  %v1062 = vsub.s32 0, %v1061
  %v1063 = vrot.slane %v1058, %v1062
  %v1066 = vsel %vm52, %v1046, 0
  %v1069 = vsel %vm52, %v1047, 0
  %v1072 = vsel %vm52, %v1048, 0
  %v1075 = vsel %vm52, %v1049, 0
  %v1078 = vsel %vm52, %v1050, 0
  %v1081 = vsel %vm52, %v1051, 0
  %v1084 = vsel %vm52, %v1052, 0
  %v1087 = vsel %vm52, %v1053, 0
  %1089 = vmatprep.subr.mxu0 0.0
  %1090 = vmatpush1.msra.mxu0 0.0
  %1091 = vmatprep.subr.mxu0 0.0
  %1092 = vmatpush1.msra.mxu0 0.0
  %1093 = vmatprep.subr.mxu0 0.0
  %1094 = vmatpush1.msra.mxu0 0.0
  %1095 = vmatprep.subr.mxu0 0.0
  %1096 = vmatpush1.msra.mxu0 0.0
  %1097 = vmatprep.subr.mxu0 0.0
  %1098 = vmatpush1.msra.mxu0 0.0
  %1099 = vmatprep.subr.mxu0 0.0
  %1100 = vmatpush1.msra.mxu0 0.0
  %1101 = vmatprep.subr.mxu0 0.0
  %1102 = vmatpush1.msra.mxu0 0.0
  %1103 = vmatprep.subr.mxu0 0.0
  %1104 = vmatpush1.msra.mxu0 0.0
  %1105 = vmatprep.subr.mxu0 0.0
  %1106 = vmatpush1.msra.mxu0 0.0
  %1107 = vmatprep.subr.mxu0 0.0
  %1108 = vmatpush1.msra.mxu0 0.0
  %1109 = vmatprep.subr.mxu0 0.0
  %1110 = vmatpush1.msra.mxu0 0.0
  %1111 = vmatprep.subr.mxu0 0.0
  %1112 = vmatpush1.msra.mxu0 0.0
  %1113 = vmatprep.subr.mxu0 0.0
  %1114 = vmatpush1.msra.mxu0 %v1057
  %1115 = vmatprep.subr.mxu0 0.0
  %1116 = vmatpush1.msra.mxu0 %v1056
  %1117 = vmatprep.subr.mxu0 0.0
  %1118 = vmatpush1.msra.mxu0 %v1055
  %1119 = vmatprep.subr.mxu0 0.0
  %1120 = vmatpush1.msra.mxu0 %v1054
  %1121 = vmatprep.subr.mxu0 0.0
  %1122 = vmatpush2.msra.mxu0 0.0
  %1123 = vmatprep.subr.mxu0 0.0
  %1124 = vmatpush2.msra.mxu0 0.0
  %1125 = vmatprep.subr.mxu0 0.0
  %1126 = vmatpush2.msra.mxu0 0.0
  %1127 = vmatprep.subr.mxu0 0.0
  %1128 = vmatpush2.msra.mxu0 0.0
  %1129 = vmatprep.subr.mxu0 0.0
  %1130 = vmatpush2.msra.mxu0 0.0
  %1131 = vmatprep.subr.mxu0 0.0
  %1132 = vmatpush2.msra.mxu0 0.0
  %1133 = vmatprep.subr.mxu0 0.0
  %1134 = vmatpush2.msra.mxu0 0.0
  %1135 = vmatprep.subr.mxu0 0.0
  %1136 = vmatpush2.msra.mxu0 0.0
  %1137 = vmatprep.subr.mxu0 0.0
  %1138 = vmatpush2.msra.mxu0 0.0
  %1139 = vmatprep.subr.mxu0 0.0
  %1140 = vmatpush2.msra.mxu0 0.0
  %1141 = vmatprep.subr.mxu0 0.0
  %1142 = vmatpush2.msra.mxu0 0.0
  %1143 = vmatprep.subr.mxu0 0.0
  %1144 = vmatpush2.msra.mxu0 0.0
  %1145 = vmatprep.subr.mxu0 0.0
  %1146 = vmatpush2.msra.mxu0 0.0
  %1147 = vmatprep.subr.mxu0 0.0
  %1148 = vmatpush2.msra.mxu0 0.0
  %1149 = vmatprep.subr.mxu0 0.0
  %1150 = vmatpush2.msra.mxu0 0.0
  %1151 = vmatprep.subr.mxu0 0.0
  %1152 = vmatpush2.msra.mxu0 0.0
  %1153 = vmatprep.mubr.f32.mxu0 0.0
  %1154 = vmatmul.mubr.f32.gmra.mxu0 %v1066
  %v1155 = vpop.f32.mrf.mxu0
  %v1156 = vadd.f32 %v1063, %v1155
  %v1157 = vpop.f32.mrf.mxu0
  %1158 = vmatprep.mubr.f32.mxu0 0.0
  %1159 = vmatmul.mubr.f32.gmra.mxu0 %v1069
  %v1160 = vpop.f32.mrf.mxu0
  %v1161 = vadd.f32 %v1063, %v1160
  %v1162 = vpop.f32.mrf.mxu0
  %1163 = vmatprep.mubr.f32.mxu0 0.0
  %1164 = vmatmul.mubr.f32.gmra.mxu0 %v1072
  %v1165 = vpop.f32.mrf.mxu0
  %v1166 = vadd.f32 %v1063, %v1165
  %v1167 = vpop.f32.mrf.mxu0
  %1168 = vmatprep.mubr.f32.mxu0 0.0
  %1169 = vmatmul.mubr.f32.gmra.mxu0 %v1075
  %v1170 = vpop.f32.mrf.mxu0
  %v1171 = vadd.f32 %v1063, %v1170
  %v1172 = vpop.f32.mrf.mxu0
  %1173 = vmatprep.mubr.f32.mxu0 0.0
  %1174 = vmatmul.mubr.f32.gmra.mxu0 %v1078
  %v1175 = vpop.f32.mrf.mxu0
  %v1176 = vadd.f32 %v1063, %v1175
  %v1177 = vpop.f32.mrf.mxu0
  %1178 = vmatprep.mubr.f32.mxu0 0.0
  %1179 = vmatmul.mubr.f32.gmra.mxu0 %v1081
  %v1180 = vpop.f32.mrf.mxu0
  %v1181 = vadd.f32 %v1063, %v1180
  %v1182 = vpop.f32.mrf.mxu0
  %1183 = vmatprep.mubr.f32.mxu0 0.0
  %1184 = vmatmul.mubr.f32.gmra.mxu0 %v1084
  %v1185 = vpop.f32.mrf.mxu0
  %v1186 = vadd.f32 %v1063, %v1185
  %v1187 = vpop.f32.mrf.mxu0
  %1188 = vmatprep.mubr.f32.mxu0 0.0
  %1189 = vmatmul.mubr.f32.gmra.mxu0 %v1087
  %v1190 = vpop.f32.mrf.mxu0
  %v1191 = vadd.f32 %v1063, %v1190
  %v1192 = vpop.f32.mrf.mxu0
  %1193 = vdwg.mxu0
  %vm1194 = vcmp.ge.f32.partialorder %v1156, 0.0
  %vm1195 = vcmp.ge.f32.partialorder %v1161, 0.0
  %vm1196 = vcmp.ge.f32.partialorder %v1166, 0.0
  %vm1197 = vcmp.ge.f32.partialorder %v1171, 0.0
  %vm1198 = vcmp.ge.f32.partialorder %v1176, 0.0
  %vm1199 = vcmp.ge.f32.partialorder %v1181, 0.0
  %vm1200 = vcmp.ge.f32.partialorder %v1186, 0.0
  %vm1201 = vcmp.ge.f32.partialorder %v1191, 0.0
  %v1202 = vmul.f32 %v1156, 0.01
  %v1203 = vmul.f32 %v1161, 0.01
  %v1204 = vmul.f32 %v1166, 0.01
  %v1205 = vmul.f32 %v1171, 0.01
  %v1206 = vmul.f32 %v1176, 0.01
  %v1207 = vmul.f32 %v1181, 0.01
  %v1208 = vmul.f32 %v1186, 0.01
  %v1209 = vmul.f32 %v1191, 0.01
  %v1210 = vsel %vm1194, %v1156, %v1202
  %v1211 = vsel %vm1195, %v1161, %v1203
  %v1212 = vsel %vm1196, %v1166, %v1204
  %v1213 = vsel %vm1197, %v1171, %v1205
  %v1214 = vsel %vm1198, %v1176, %v1206
  %v1215 = vsel %vm1199, %v1181, %v1207
  %v1216 = vsel %vm1200, %v1186, %v1208
  %v1217 = vsel %vm1201, %v1191, %v1209
  %v1218 = vld [vmem:[%s6] sm:$0x1]
  %v1220 = vlaneseq
  %v1221 = vshrl.u32 %v1220, 7
  %v1222 = vsub.s32 0, %v1221
  %v1223 = vrot.slane %v1218, %v1222
  %v1225 = vmul.f32 %v1210, %v1223
  %v1226 = vmul.f32 %v1211, %v1223
  %v1227 = vmul.f32 %v1212, %v1223
  %v1228 = vmul.f32 %v1213, %v1223
  %v1229 = vmul.f32 %v1214, %v1223
  %v1230 = vmul.f32 %v1215, %v1223
  %v1231 = vmul.f32 %v1216, %v1223
  %v1232 = vmul.f32 %v1217, %v1223
  %1233 = vadd.xlane.f32.xlu0 %v1225
  %v1234 = vpop.xlane.xlu0 %1233
  %1235 = vadd.xlane.f32.xlu0 %v1226
  %v1236 = vpop.xlane.xlu0 %1235
  %1237 = vadd.xlane.f32.xlu0 %v1227
  %v1238 = vpop.xlane.xlu0 %1237
  %1239 = vadd.xlane.f32.xlu0 %v1228
  %v1240 = vpop.xlane.xlu0 %1239
  %1241 = vadd.xlane.f32.xlu0 %v1229
  %v1242 = vpop.xlane.xlu0 %1241
  %1243 = vadd.xlane.f32.xlu0 %v1230
  %v1244 = vpop.xlane.xlu0 %1243
  %1245 = vadd.xlane.f32.xlu0 %v1231
  %v1246 = vpop.xlane.xlu0 %1245
  %1247 = vadd.xlane.f32.xlu0 %v1232
  %v1248 = vpop.xlane.xlu0 %1247
  %v1249 = vsub.f32 0.0, %v1234
  %v1250 = vsub.f32 0.0, %v1236
  %v1251 = vsub.f32 0.0, %v1238
  %v1252 = vsub.f32 0.0, %v1240
  %v1253 = vsub.f32 0.0, %v1242
  %v1254 = vsub.f32 0.0, %v1244
  %v1255 = vsub.f32 0.0, %v1246
  %v1256 = vsub.f32 0.0, %v1248
  %v1257 = vmul.f32 %v1249, 1.442695
  %v1258 = vpow.pop %v1257
  %v1259 = vmul.f32 %v1250, 1.442695
  %v1260 = vpow.pop %v1259
  %v1261 = vmul.f32 %v1251, 1.442695
  %v1262 = vpow.pop %v1261
  %v1263 = vmul.f32 %v1252, 1.442695
  %v1264 = vpow.pop %v1263
  %v1265 = vmul.f32 %v1253, 1.442695
  %v1266 = vpow.pop %v1265
  %v1267 = vmul.f32 %v1254, 1.442695
  %v1268 = vpow.pop %v1267
  %v1269 = vmul.f32 %v1255, 1.442695
  %v1270 = vpow.pop %v1269
  %v1271 = vmul.f32 %v1256, 1.442695
  %v1272 = vpow.pop %v1271
  %v1273 = vadd.f32 %v1258, 1.0
  %v1274 = vadd.f32 %v1260, 1.0
  %v1275 = vadd.f32 %v1262, 1.0
  %v1276 = vadd.f32 %v1264, 1.0
  %v1277 = vadd.f32 %v1266, 1.0
  %v1278 = vadd.f32 %v1268, 1.0
  %v1279 = vadd.f32 %v1270, 1.0
  %v1280 = vadd.f32 %v1272, 1.0
  %v1281 = vrcp.pop %v1273
  %v1282 = vmul.f32 1.0, %v1281
  %v1283 = vrcp.pop %v1274
  %v1284 = vmul.f32 1.0, %v1283
  %v1285 = vrcp.pop %v1275
  %v1286 = vmul.f32 1.0, %v1285
  %v1287 = vrcp.pop %v1276
  %v1288 = vmul.f32 1.0, %v1287
  %v1289 = vrcp.pop %v1277
  %v1290 = vmul.f32 1.0, %v1289
  %v1291 = vrcp.pop %v1278
  %v1292 = vmul.f32 1.0, %v1291
  %v1293 = vrcp.pop %v1279
  %v1294 = vmul.f32 1.0, %v1293
  %v1295 = vrcp.pop %v1280
  %v1296 = vmul.f32 1.0, %v1295
  %vm1297 = vcmask 7168
  %1298 = vst.msk [vmem:[%s7] sm:$0xff] %vm1297, %v1282
  %1299 = vst.msk [vmem:[%s7 + $0x8] sm:$0xff] %vm1297, %v1284
  %1300 = vst.msk [vmem:[%s7 + $0x10] sm:$0xff] %vm1297, %v1286
  %1301 = vst.msk [vmem:[%s7 + $0x18] sm:$0xff] %vm1297, %v1288
  %1302 = vst.msk [vmem:[%s7 + $0x20] sm:$0xff] %vm1297, %v1290
  %1303 = vst.msk [vmem:[%s7 + $0x28] sm:$0xff] %vm1297, %v1292
  %1304 = vst.msk [vmem:[%s7 + $0x30] sm:$0xff] %vm1297, %v1294
  %1305 = vst.msk [vmem:[%s7 + $0x38] sm:$0xff] %vm1297, %v1296
  // Predicated region
  $region34: #{binary_lstm_forward.1} parent=0 // pred_check
    _
  $region35: #{binary_lstm_forward.1} parent=0 // pred_check_branch
    %1307 = sbr.rel (0) target = $region37
  $region36: #{binary_lstm_forward.1} parent=0 // pred_region
    _
  $region37: #{binary_lstm_forward.1} parent=0 // pred_fallthru
    _
  // Predicated region
  $region38: #{binary_lstm_forward.1} parent=0 // pred_check
    _
  $region39: #{binary_lstm_forward.1} parent=0 // pred_check_branch
    %1309 = sbr.rel (0) target = $region41
  $region40: #{binary_lstm_forward.1} parent=0 // pred_region
    _
  $region41: #{binary_lstm_forward.1} parent=0 // pred_fallthru
    _

</llo_original>
